<compile_context>
chip_gen: v5e
topology: v5e:2x2
jax: 0.10.0
libtpu: 0.0.40
codegen_flags: <defaults>
</compile_context>

<pallas_src>
import functools

import jax
import jax.numpy as jnp
from jax.experimental import pallas as pl
from jax.experimental.pallas import tpu as pltpu


# ------------------------------ small helpers ------------------------------ #
def _round_up(x, m):
    return (x + m - 1) // m * m


def _pad_axis(a, axis, new_size):
    extra = new_size - a.shape[axis]
    if extra == 0:
        return a
    widths = [(0, 0)] * a.ndim
    widths[axis] = (0, extra)
    return jnp.pad(a, widths)


def fold_bn(gamma, beta, mean, var, eps=1e-5):
    scale = gamma / jnp.sqrt(var + eps)
    bias = beta - mean * scale
    return scale, bias


# ------------------------------ Pallas kernel ------------------------------ #
def _basic_block_kernel(x_ref, w1_ref, b1_ref, w2_ref, b2_ref, ws_ref, bs_ref,
                        ml_ref, mr_ref, o_ref, o1_ref, *,
                        stride, H1, W1, pad):
    """Fused BasicBlock forward for one batch image.

    x_ref : (s*s, pad + H1*W1 + pad, Cin_p) f32  phase-split, row-flattened
            input; zero rows above/below give the vertical conv padding.
    w1_ref: (9, Cin_p, Cp) bf16  conv1 3x3 weights (BN1 scale folded in)
    w2_ref: (9, Cp, Cp)    bf16  conv2 3x3 weights (BN2 scale folded in)
    ws_ref: (Cin_p, Cp)    bf16  1x1 shortcut weights (eye matrix if identity)
    b*_ref: (1, Cp)        f32   folded BN biases
    ml/mr : (M1, 1)        f32   left / right spatial-boundary masks
    o_ref : (M1, Cp)             output (flat spatial rows, lane-dense C)
    o1_ref: (pad + M1 + pad, Cp) f32 VMEM scratch for conv1 activations
    """
    s = stride
    M1 = H1 * W1
    cp = w2_ref.shape[-1]
    f32 = jnp.float32

    mask_l = ml_ref[...]                       # 1.0 where column wo-1 is valid
    mask_r = mr_ref[...]                       # 1.0 where column wo+1 is valid

    def in_tap(ky, kx):
        # Tap (ky, kx) of a 3x3, stride-s, pad-1 conv over the input, realised
        # as one sublane-shifted slice of the matching stride phase + mask.
        py, px = (ky - 1) % s, (kx - 1) % s    # which phase the tap reads
        dy, dx = (ky - 1) // s, (kx - 1) // s  # offset within the phase grid
        v = x_ref[py * s + px, pl.ds(pad + dy * W1 + dx, M1), :]
        if dx == -1:
            v = v * mask_l
        elif dx == 1:
            v = v * mask_r
        return v.astype(jnp.bfloat16)

    # ---- conv1 (3x3, stride s): 9 shifted-tap MXU matmuls, f32 accumulate --
    acc1 = jnp.zeros((M1, cp), f32)
    for t in range(9):
        ky, kx = divmod(t, 3)
        acc1 = acc1 + jnp.dot(in_tap(ky, kx), w1_ref[t],
                              preferred_element_type=f32)
    out1 = jnp.maximum(acc1 + b1_ref[...], 0.0)        # BN1 bias + ReLU

    # Stage out1 in a zero-padded VMEM scratch so conv2 taps are again plain
    # sublane-shifted slices (pad rows provide the vertical zero padding).
    o1_ref[pl.ds(0, pad), :] = jnp.zeros((pad, cp), f32)
    o1_ref[pl.ds(pad + M1, pad), :] = jnp.zeros((pad, cp), f32)
    o1_ref[pl.ds(pad, M1), :] = out1

    # ---- shortcut (1x1 conv, stride s) seeds the conv2 accumulator --------
    acc2 = jnp.dot(in_tap(1, 1), ws_ref[...], preferred_element_type=f32)
    acc2 = acc2 + bs_ref[...] + b2_ref[...]

    # ---- conv2 (3x3, stride 1) over out1, never leaving VMEM --------------
    for t in range(9):
        ky, kx = divmod(t, 3)
        dy, dx = ky - 1, kx - 1
        v = o1_ref[pl.ds(pad + dy * W1 + dx, M1), :]
        if dx == -1:
            v = v * mask_l
        elif dx == 1:
            v = v * mask_r
        acc2 = acc2 + jnp.dot(v.astype(jnp.bfloat16), w2_ref[t],
                              preferred_element_type=f32)

    # ---- residual already folded into acc2; final ReLU --------------------
    o_ref[...] = jnp.maximum(acc2, 0.0).astype(o_ref.dtype)


# --------------------------------- JAX glue -------------------------------- #
def basic_block_forward_nhwc(x, params, stride, out_dtype=jnp.float32):
    """Fused BasicBlock forward, NHWC in / NHWC out (eval-mode BatchNorm)."""
    N, H, W, Cin = x.shape
    planes = params["w1"].shape[-1]
    s = int(stride)
    assert s in (1, 2)
    assert H % s == 0 and W % s == 0
    H1, W1 = H // s, W // s
    assert W1 % 8 == 0, "flattened-row conv needs the output width % 8 == 0"
    M1 = H1 * W1
    pad = 2 * W1                       # zero rows above/below each flat phase

    Cp = _round_up(planes, 128)        # lane-dense output channels
    Cin_p = _round_up(Cin, 8)          # sublane-aligned input channels

    # ---- fold eval-mode BN scale into conv weights, pad channels ----------
    s1, b1 = fold_bn(*params["bn1"])
    s2, b2 = fold_bn(*params["bn2"])
    w1 = params["w1"].astype(jnp.float32) * s1
    w2 = params["w2"].astype(jnp.float32) * s2
    if s != 1 or Cin != planes:
        ss, bs = fold_bn(*params["bns"])
        ws = params["ws"][0, 0].astype(jnp.float32) * ss        # (Cin, planes)
    else:
        ws = jnp.eye(Cin, dtype=jnp.float32)                    # identity
        bs = jnp.zeros((planes,), jnp.float32)

    w1p = _pad_axis(_pad_axis(w1, 2, Cin_p), 3, Cp).reshape(9, Cin_p, Cp)
    w2p = _pad_axis(_pad_axis(w2, 2, Cp), 3, Cp).reshape(9, Cp, Cp)
    wsp = _pad_axis(_pad_axis(ws, 0, Cin_p), 1, Cp)
    w1p, w2p, wsp = (a.astype(jnp.bfloat16) for a in (w1p, w2p, wsp))
    b1p = _pad_axis(b1.astype(jnp.float32), 0, Cp).reshape(1, Cp)
    b2p = _pad_axis(b2.astype(jnp.float32), 0, Cp).reshape(1, Cp)
    bsp = _pad_axis(bs.astype(jnp.float32), 0, Cp).reshape(1, Cp)

    # ---- input: channel pad, stride phase split, flatten, add zero rows ----
    xc = _pad_axis(x.astype(jnp.float32), 3, Cin_p)
    xr = xc.reshape(N, H1, s, W1, s, Cin_p).transpose(0, 2, 4, 1, 3, 5)
    xf = xr.reshape(N, s * s, M1, Cin_p)
    zrows = jnp.zeros((N, s * s, pad, Cin_p), jnp.float32)
    xk = jnp.concatenate([zrows, xf, zrows], axis=2)
    Mx = M1 + 2 * pad

    # ---- spatial boundary masks (precomputed: no in-kernel iota / mod) -----
    col = (jnp.arange(M1, dtype=jnp.int32) % W1).reshape(M1, 1)
    mask_l = (col >= 1).astype(jnp.float32)
    mask_r = (col <= W1 - 2).astype(jnp.float32)

    kernel = functools.partial(_basic_block_kernel,
                               stride=s, H1=H1, W1=W1, pad=pad)

    flops = 2 * N * M1 * Cp * (9 * Cin_p + 9 * Cp + Cin_p)
    bytes_accessed = (xk.size * 4
                      + (w1p.size + w2p.size + wsp.size) * 2
                      + (b1p.size + b2p.size + bsp.size) * 4
                      + (mask_l.size + mask_r.size) * 4
                      + N * M1 * Cp * jnp.dtype(out_dtype).itemsize)

    out_flat = pl.pallas_call(
        kernel,
        out_shape=jax.ShapeDtypeStruct((N, M1, Cp), out_dtype),
        grid=(N,),
        in_specs=[
            pl.BlockSpec((None, s * s, Mx, Cin_p), lambda n: (n, 0, 0, 0)),
            pl.BlockSpec((9, Cin_p, Cp), lambda n: (0, 0, 0)),
            pl.BlockSpec((1, Cp), lambda n: (0, 0)),
            pl.BlockSpec((9, Cp, Cp), lambda n: (0, 0, 0)),
            pl.BlockSpec((1, Cp), lambda n: (0, 0)),
            pl.BlockSpec((Cin_p, Cp), lambda n: (0, 0)),
            pl.BlockSpec((1, Cp), lambda n: (0, 0)),
            pl.BlockSpec((M1, 1), lambda n: (0, 0)),
            pl.BlockSpec((M1, 1), lambda n: (0, 0)),
        ],
        out_specs=pl.BlockSpec((None, M1, Cp), lambda n: (n, 0, 0)),
        scratch_shapes=[pltpu.VMEM((Mx, Cp), jnp.float32)],
        compiler_params=pltpu.CompilerParams(
            dimension_semantics=("parallel",),        # megacore on v7x
            vmem_limit_bytes=32 * 1024 * 1024,
        ),
        cost_estimate=pl.CostEstimate(
            flops=int(flops), transcendentals=0,
            bytes_accessed=int(bytes_accessed)),
    )(xk, w1p, b1p, w2p, b2p, wsp, bsp, mask_l, mask_r)

    out = out_flat.reshape(N, H1, W1, Cp)[..., :planes]
    return out


def basic_block_forward(x_nchw, params, stride, out_dtype=jnp.float32):
    # In a full network keep activations NHWC and call basic_block_forward_nhwc
    # directly; the transposes here only adapt the PyTorch NCHW interface.
    x = jnp.transpose(x_nchw, (0, 2, 3, 1))
    out = basic_block_forward_nhwc(x, params, stride, out_dtype)
    return jnp.transpose(out, (0, 3, 1, 2))


# ----------------------------- pure-JAX reference --------------------------- #
def _conv(x, w, stride, pad):
    return jax.lax.conv_general_dilated(
        x, w, (stride, stride), [(pad, pad), (pad, pad)],
        dimension_numbers=("NHWC", "HWIO", "NHWC"))


def reference_block(x_nchw, params, stride):
    x = jnp.transpose(x_nchw, (0, 2, 3, 1)).astype(jnp.float32)
    N, H, W, Cin = x.shape
    planes = params["w1"].shape[-1]
    s1, b1 = fold_bn(*params["bn1"])
    s2, b2 = fold_bn(*params["bn2"])
    out = jnp.maximum(_conv(x, params["w1"], stride, 1) * s1 + b1, 0.0)
    out = _conv(out, params["w2"], 1, 1) * s2 + b2
    if stride != 1 or Cin != planes:
        ss, bs = fold_bn(*params["bns"])
        sc = _conv(x, params["ws"], stride, 0) * ss + bs
    else:
        sc = x
    out = jnp.maximum(out + sc, 0.0)
    return jnp.transpose(out, (0, 3, 1, 2))


# ----------------------------------- main ----------------------------------- #
if __name__ == "__main__":
    def make_params(key, in_planes, planes, with_shortcut):
        keys = jax.random.split(key, 16)
        params = {
            "w1": jax.random.normal(keys[0], (3, 3, in_planes, planes),
                                    jnp.float32) * 0.1,
            "w2": jax.random.normal(keys[1], (3, 3, planes, planes),
                                    jnp.float32) * 0.1,
            "bn1": (1.0 + 0.1 * jax.random.normal(keys[2], (planes,)),
                    0.1 * jax.random.normal(keys[3], (planes,)),
                    0.1 * jax.random.normal(keys[4], (planes,)),
                    1.0 + 0.1 * jax.random.uniform(keys[5], (planes,))),
            "bn2": (1.0 + 0.1 * jax.random.normal(keys[6], (planes,)),
                    0.1 * jax.random.normal(keys[7], (planes,)),
                    0.1 * jax.random.normal(keys[8], (planes,)),
                    1.0 + 0.1 * jax.random.uniform(keys[9], (planes,))),
        }
        if with_shortcut:
            params["ws"] = jax.random.normal(
                keys[10], (1, 1, in_planes, planes), jnp.float32) * 0.1
            params["bns"] = (1.0 + 0.1 * jax.random.normal(keys[11], (planes,)),
                             0.1 * jax.random.normal(keys[12], (planes,)),
                             0.1 * jax.random.normal(keys[13], (planes,)),
                             1.0 + 0.1 * jax.random.uniform(keys[14], (planes,)))
        return params, keys[15]

    fwd = jax.jit(basic_block_forward, static_argnums=(2,))
    root = jax.random.PRNGKey(0)
    key_a, key_b = jax.random.split(root)

    # --- config A: downsampling block (stride 2, 1x1-conv shortcut) ---------
    N, in_planes, planes, H, W, stride = 2, 4, 8, 16, 16, 2
    params, kx = make_params(key_a, in_planes, planes, with_shortcut=True)
    x = jax.random.normal(kx, (N, in_planes, H, W), jnp.float32)

    out = jax.block_until_ready(fwd(x, params, stride))
    ref = jax.block_until_ready(reference_block(x, params, stride))
    assert out.shape == (N, planes, H // stride, W // stride), out.shape
    err = float(jnp.max(jnp.abs(out - ref)))
    assert jnp.allclose(out, ref, atol=5e-2, rtol=5e-2), (
        f"mismatch vs reference (stride-2 block), max abs err {err}")

    # --- config B: identity-shortcut block (stride 1, in_planes == planes) --
    N2, planes2, H2, W2 = 2, 8, 16, 16
    params2, kx2 = make_params(key_b, planes2, planes2, with_shortcut=False)
    x2 = jax.random.normal(kx2, (N2, planes2, H2, W2), jnp.float32)

    out2 = jax.block_until_ready(fwd(x2, params2, 1))
    ref2 = jax.block_until_ready(reference_block(x2, params2, 1))
    assert out2.shape == (N2, planes2, H2, W2), out2.shape
    err2 = float(jnp.max(jnp.abs(out2 - ref2)))
    assert jnp.allclose(out2, ref2, atol=5e-2, rtol=5e-2), (
        f"mismatch vs reference (identity block), max abs err {err2}")

    print("KERNEL_OK")
</pallas_src>

<mosaic_0001>
module attributes {stable_mosaic.version = 11 : i64} {
  func.func @_basic_block_kernel(%arg0: i32, %arg1: memref<1x4x96x8xf32, #tpu.memory_space<vmem>>, %arg2: memref<9x8x128xbf16, #tpu.memory_space<vmem>>, %arg3: memref<1x128xf32, #tpu.memory_space<vmem>>, %arg4: memref<9x128x128xbf16, #tpu.memory_space<vmem>>, %arg5: memref<1x128xf32, #tpu.memory_space<vmem>>, %arg6: memref<8x128xbf16, #tpu.memory_space<vmem>>, %arg7: memref<1x128xf32, #tpu.memory_space<vmem>>, %arg8: memref<64x1xf32, #tpu.memory_space<vmem>>, %arg9: memref<64x1xf32, #tpu.memory_space<vmem>>, %arg10: memref<1x64x128xf32, #tpu.memory_space<vmem>>, %arg11: memref<96x128xf32, #tpu.memory_space<vmem>>) attributes {dimension_semantics = [#tpu.dimension_semantics<parallel>], iteration_bounds = array<i64: 2>, scalar_prefetch = 0 : i64, scratch_operands = 1 : i64, tpu.core_type = #tpu.core_type<tc>, window_params = [{transform_indices = @transform_0, window_bounds = array<i64: 1, 4, 96, 8>}, {pipeline_mode = #tpu.pipeline_mode<synchronous>, transform_indices = @transform_1, window_bounds = array<i64: 9, 8, 128>}, {pipeline_mode = #tpu.pipeline_mode<synchronous>, transform_indices = @transform_2, window_bounds = array<i64: 1, 128>}, {pipeline_mode = #tpu.pipeline_mode<synchronous>, transform_indices = @transform_3, window_bounds = array<i64: 9, 128, 128>}, {pipeline_mode = #tpu.pipeline_mode<synchronous>, transform_indices = @transform_4, window_bounds = array<i64: 1, 128>}, {pipeline_mode = #tpu.pipeline_mode<synchronous>, transform_indices = @transform_5, window_bounds = array<i64: 8, 128>}, {pipeline_mode = #tpu.pipeline_mode<synchronous>, transform_indices = @transform_6, window_bounds = array<i64: 1, 128>}, {pipeline_mode = #tpu.pipeline_mode<synchronous>, transform_indices = @transform_7, window_bounds = array<i64: 64, 1>}, {pipeline_mode = #tpu.pipeline_mode<synchronous>, transform_indices = @transform_8, window_bounds = array<i64: 64, 1>}, {transform_indices = @transform_9, window_bounds = array<i64: 1, 64, 128>}]} {
    %c0 = arith.constant 0 : index
    %c0_0 = arith.constant 0 : index
    %0 = vector.load %arg8[%c0, %c0_0] : memref<64x1xf32, #tpu.memory_space<vmem>>, vector<64x1xf32>
    %c0_1 = arith.constant 0 : index
    %c0_2 = arith.constant 0 : index
    %1 = vector.load %arg9[%c0_1, %c0_2] : memref<64x1xf32, #tpu.memory_space<vmem>>, vector<64x1xf32>
    %cst = arith.constant 0.000000e+00 : f32
    %2 = vector.broadcast %cst : f32 to vector<64x128xf32>
    %c0_3 = arith.constant 0 : index
    %c3 = arith.constant 3 : index
    %c7 = arith.constant 7 : index
    %c0_4 = arith.constant 0 : index
    %3 = vector.load %arg1[%c0_3, %c3, %c7, %c0_4] : memref<1x4x96x8xf32, #tpu.memory_space<vmem>>, vector<1x1x64x8xf32>
    %4 = vector.shape_cast %3 : vector<1x1x64x8xf32> to vector<64x8xf32>
    %5 = vector.broadcast %0 : vector<64x1xf32> to vector<64x8xf32>
    %6 = arith.mulf %4, %5 : vector<64x8xf32>
    %7 = arith.truncf %6 : vector<64x8xf32> to vector<64x8xbf16>
    %c0_5 = arith.constant 0 : index
    %c0_6 = arith.constant 0 : index
    %c0_7 = arith.constant 0 : index
    %8 = vector.load %arg2[%c0_5, %c0_6, %c0_7] : memref<9x8x128xbf16, #tpu.memory_space<vmem>>, vector<1x8x128xbf16>
    %9 = vector.shape_cast %8 : vector<1x8x128xbf16> to vector<8x128xbf16>
    %cst_8 = arith.constant dense<0.000000e+00> : vector<64x128xf32>
    %10 = tpu.matmul %7, %9, %cst_8 {dimension_numbers = #tpu.dot_dimension_numbers<[1], [0], [0], [1], [0, 0, 1, 1], [], []>} : vector<64x8xbf16>, vector<8x128xbf16>, vector<64x128xf32> -> vector<64x128xf32>
    %11 = arith.addf %2, %10 : vector<64x128xf32>
    %c0_9 = arith.constant 0 : index
    %c2 = arith.constant 2 : index
    %c8 = arith.constant 8 : index
    %c0_10 = arith.constant 0 : index
    %12 = vector.load %arg1[%c0_9, %c2, %c8, %c0_10] : memref<1x4x96x8xf32, #tpu.memory_space<vmem>>, vector<1x1x64x8xf32>
    %13 = vector.shape_cast %12 : vector<1x1x64x8xf32> to vector<64x8xf32>
    %14 = arith.truncf %13 : vector<64x8xf32> to vector<64x8xbf16>
    %c1 = arith.constant 1 : index
    %c0_11 = arith.constant 0 : index
    %c0_12 = arith.constant 0 : index
    %15 = vector.load %arg2[%c1, %c0_11, %c0_12] : memref<9x8x128xbf16, #tpu.memory_space<vmem>>, vector<1x8x128xbf16>
    %16 = vector.shape_cast %15 : vector<1x8x128xbf16> to vector<8x128xbf16>
    %cst_13 = arith.constant dense<0.000000e+00> : vector<64x128xf32>
    %17 = tpu.matmul %14, %16, %cst_13 {dimension_numbers = #tpu.dot_dimension_numbers<[1], [0], [0], [1], [0, 0, 1, 1], [], []>} : vector<64x8xbf16>, vector<8x128xbf16>, vector<64x128xf32> -> vector<64x128xf32>
    %18 = arith.addf %11, %17 : vector<64x128xf32>
    %c0_14 = arith.constant 0 : index
    %c3_15 = arith.constant 3 : index
    %c8_16 = arith.constant 8 : index
    %c0_17 = arith.constant 0 : index
    %19 = vector.load %arg1[%c0_14, %c3_15, %c8_16, %c0_17] : memref<1x4x96x8xf32, #tpu.memory_space<vmem>>, vector<1x1x64x8xf32>
    %20 = vector.shape_cast %19 : vector<1x1x64x8xf32> to vector<64x8xf32>
    %21 = arith.truncf %20 : vector<64x8xf32> to vector<64x8xbf16>
    %c2_18 = arith.constant 2 : index
    %c0_19 = arith.constant 0 : index
    %c0_20 = arith.constant 0 : index
    %22 = vector.load %arg2[%c2_18, %c0_19, %c0_20] : memref<9x8x128xbf16, #tpu.memory_space<vmem>>, vector<1x8x128xbf16>
    %23 = vector.shape_cast %22 : vector<1x8x128xbf16> to vector<8x128xbf16>
    %cst_21 = arith.constant dense<0.000000e+00> : vector<64x128xf32>
    %24 = tpu.matmul %21, %23, %cst_21 {dimension_numbers = #tpu.dot_dimension_numbers<[1], [0], [0], [1], [0, 0, 1, 1], [], []>} : vector<64x8xbf16>, vector<8x128xbf16>, vector<64x128xf32> -> vector<64x128xf32>
    %25 = arith.addf %18, %24 : vector<64x128xf32>
    %c0_22 = arith.constant 0 : index
    %c1_23 = arith.constant 1 : index
    %c15 = arith.constant 15 : index
    %c0_24 = arith.constant 0 : index
    %26 = vector.load %arg1[%c0_22, %c1_23, %c15, %c0_24] : memref<1x4x96x8xf32, #tpu.memory_space<vmem>>, vector<1x1x64x8xf32>
    %27 = vector.shape_cast %26 : vector<1x1x64x8xf32> to vector<64x8xf32>
    %28 = vector.broadcast %0 : vector<64x1xf32> to vector<64x8xf32>
    %29 = arith.mulf %27, %28 : vector<64x8xf32>
    %30 = arith.truncf %29 : vector<64x8xf32> to vector<64x8xbf16>
    %c3_25 = arith.constant 3 : index
    %c0_26 = arith.constant 0 : index
    %c0_27 = arith.constant 0 : index
    %31 = vector.load %arg2[%c3_25, %c0_26, %c0_27] : memref<9x8x128xbf16, #tpu.memory_space<vmem>>, vector<1x8x128xbf16>
    %32 = vector.shape_cast %31 : vector<1x8x128xbf16> to vector<8x128xbf16>
    %cst_28 = arith.constant dense<0.000000e+00> : vector<64x128xf32>
    %33 = tpu.matmul %30, %32, %cst_28 {dimension_numbers = #tpu.dot_dimension_numbers<[1], [0], [0], [1], [0, 0, 1, 1], [], []>} : vector<64x8xbf16>, vector<8x128xbf16>, vector<64x128xf32> -> vector<64x128xf32>
    %34 = arith.addf %25, %33 : vector<64x128xf32>
    %c0_29 = arith.constant 0 : index
    %c0_30 = arith.constant 0 : index
    %c16 = arith.constant 16 : index
    %c0_31 = arith.constant 0 : index
    %35 = vector.load %arg1[%c0_29, %c0_30, %c16, %c0_31] : memref<1x4x96x8xf32, #tpu.memory_space<vmem>>, vector<1x1x64x8xf32>
    %36 = vector.shape_cast %35 : vector<1x1x64x8xf32> to vector<64x8xf32>
    %37 = arith.truncf %36 : vector<64x8xf32> to vector<64x8xbf16>
    %c4 = arith.constant 4 : index
    %c0_32 = arith.constant 0 : index
    %c0_33 = arith.constant 0 : index
    %38 = vector.load %arg2[%c4, %c0_32, %c0_33] : memref<9x8x128xbf16, #tpu.memory_space<vmem>>, vector<1x8x128xbf16>
    %39 = vector.shape_cast %38 : vector<1x8x128xbf16> to vector<8x128xbf16>
    %cst_34 = arith.constant dense<0.000000e+00> : vector<64x128xf32>
    %40 = tpu.matmul %37, %39, %cst_34 {dimension_numbers = #tpu.dot_dimension_numbers<[1], [0], [0], [1], [0, 0, 1, 1], [], []>} : vector<64x8xbf16>, vector<8x128xbf16>, vector<64x128xf32> -> vector<64x128xf32>
    %41 = arith.addf %34, %40 : vector<64x128xf32>
    %c0_35 = arith.constant 0 : index
    %c1_36 = arith.constant 1 : index
    %c16_37 = arith.constant 16 : index
    %c0_38 = arith.constant 0 : index
    %42 = vector.load %arg1[%c0_35, %c1_36, %c16_37, %c0_38] : memref<1x4x96x8xf32, #tpu.memory_space<vmem>>, vector<1x1x64x8xf32>
    %43 = vector.shape_cast %42 : vector<1x1x64x8xf32> to vector<64x8xf32>
    %44 = arith.truncf %43 : vector<64x8xf32> to vector<64x8xbf16>
    %c5 = arith.constant 5 : index
    %c0_39 = arith.constant 0 : index
    %c0_40 = arith.constant 0 : index
    %45 = vector.load %arg2[%c5, %c0_39, %c0_40] : memref<9x8x128xbf16, #tpu.memory_space<vmem>>, vector<1x8x128xbf16>
    %46 = vector.shape_cast %45 : vector<1x8x128xbf16> to vector<8x128xbf16>
    %cst_41 = arith.constant dense<0.000000e+00> : vector<64x128xf32>
    %47 = tpu.matmul %44, %46, %cst_41 {dimension_numbers = #tpu.dot_dimension_numbers<[1], [0], [0], [1], [0, 0, 1, 1], [], []>} : vector<64x8xbf16>, vector<8x128xbf16>, vector<64x128xf32> -> vector<64x128xf32>
    %48 = arith.addf %41, %47 : vector<64x128xf32>
    %c0_42 = arith.constant 0 : index
    %c3_43 = arith.constant 3 : index
    %c15_44 = arith.constant 15 : index
    %c0_45 = arith.constant 0 : index
    %49 = vector.load %arg1[%c0_42, %c3_43, %c15_44, %c0_45] : memref<1x4x96x8xf32, #tpu.memory_space<vmem>>, vector<1x1x64x8xf32>
    %50 = vector.shape_cast %49 : vector<1x1x64x8xf32> to vector<64x8xf32>
    %51 = vector.broadcast %0 : vector<64x1xf32> to vector<64x8xf32>
    %52 = arith.mulf %50, %51 : vector<64x8xf32>
    %53 = arith.truncf %52 : vector<64x8xf32> to vector<64x8xbf16>
    %c6 = arith.constant 6 : index
    %c0_46 = arith.constant 0 : index
    %c0_47 = arith.constant 0 : index
    %54 = vector.load %arg2[%c6, %c0_46, %c0_47] : memref<9x8x128xbf16, #tpu.memory_space<vmem>>, vector<1x8x128xbf16>
    %55 = vector.shape_cast %54 : vector<1x8x128xbf16> to vector<8x128xbf16>
    %cst_48 = arith.constant dense<0.000000e+00> : vector<64x128xf32>
    %56 = tpu.matmul %53, %55, %cst_48 {dimension_numbers = #tpu.dot_dimension_numbers<[1], [0], [0], [1], [0, 0, 1, 1], [], []>} : vector<64x8xbf16>, vector<8x128xbf16>, vector<64x128xf32> -> vector<64x128xf32>
    %57 = arith.addf %48, %56 : vector<64x128xf32>
    %c0_49 = arith.constant 0 : index
    %c2_50 = arith.constant 2 : index
    %c16_51 = arith.constant 16 : index
    %c0_52 = arith.constant 0 : index
    %58 = vector.load %arg1[%c0_49, %c2_50, %c16_51, %c0_52] : memref<1x4x96x8xf32, #tpu.memory_space<vmem>>, vector<1x1x64x8xf32>
    %59 = vector.shape_cast %58 : vector<1x1x64x8xf32> to vector<64x8xf32>
    %60 = arith.truncf %59 : vector<64x8xf32> to vector<64x8xbf16>
    %c7_53 = arith.constant 7 : index
    %c0_54 = arith.constant 0 : index
    %c0_55 = arith.constant 0 : index
    %61 = vector.load %arg2[%c7_53, %c0_54, %c0_55] : memref<9x8x128xbf16, #tpu.memory_space<vmem>>, vector<1x8x128xbf16>
    %62 = vector.shape_cast %61 : vector<1x8x128xbf16> to vector<8x128xbf16>
    %cst_56 = arith.constant dense<0.000000e+00> : vector<64x128xf32>
    %63 = tpu.matmul %60, %62, %cst_56 {dimension_numbers = #tpu.dot_dimension_numbers<[1], [0], [0], [1], [0, 0, 1, 1], [], []>} : vector<64x8xbf16>, vector<8x128xbf16>, vector<64x128xf32> -> vector<64x128xf32>
    %64 = arith.addf %57, %63 : vector<64x128xf32>
    %c0_57 = arith.constant 0 : index
    %c3_58 = arith.constant 3 : index
    %c16_59 = arith.constant 16 : index
    %c0_60 = arith.constant 0 : index
    %65 = vector.load %arg1[%c0_57, %c3_58, %c16_59, %c0_60] : memref<1x4x96x8xf32, #tpu.memory_space<vmem>>, vector<1x1x64x8xf32>
    %66 = vector.shape_cast %65 : vector<1x1x64x8xf32> to vector<64x8xf32>
    %67 = arith.truncf %66 : vector<64x8xf32> to vector<64x8xbf16>
    %c8_61 = arith.constant 8 : index
    %c0_62 = arith.constant 0 : index
    %c0_63 = arith.constant 0 : index
    %68 = vector.load %arg2[%c8_61, %c0_62, %c0_63] : memref<9x8x128xbf16, #tpu.memory_space<vmem>>, vector<1x8x128xbf16>
    %69 = vector.shape_cast %68 : vector<1x8x128xbf16> to vector<8x128xbf16>
    %cst_64 = arith.constant dense<0.000000e+00> : vector<64x128xf32>
    %70 = tpu.matmul %67, %69, %cst_64 {dimension_numbers = #tpu.dot_dimension_numbers<[1], [0], [0], [1], [0, 0, 1, 1], [], []>} : vector<64x8xbf16>, vector<8x128xbf16>, vector<64x128xf32> -> vector<64x128xf32>
    %71 = arith.addf %64, %70 : vector<64x128xf32>
    %c0_65 = arith.constant 0 : index
    %c0_66 = arith.constant 0 : index
    %72 = vector.load %arg3[%c0_65, %c0_66] : memref<1x128xf32, #tpu.memory_space<vmem>>, vector<1x128xf32>
    %73 = vector.broadcast %72 : vector<1x128xf32> to vector<64x128xf32>
    %74 = arith.addf %71, %73 : vector<64x128xf32>
    %cst_67 = arith.constant 0.000000e+00 : f32
    %75 = vector.broadcast %cst_67 : f32 to vector<64x128xf32>
    %76 = arith.maximumf %74, %75 : vector<64x128xf32>
    %cst_68 = arith.constant 0.000000e+00 : f32
    %77 = vector.broadcast %cst_68 : f32 to vector<16x128xf32>
    %c0_69 = arith.constant 0 : index
    %c0_70 = arith.constant 0 : index
    %78 = vector.load %arg11[%c0_69, %c0_70] : memref<96x128xf32, #tpu.memory_space<vmem>>, vector<16x128xf32>
    tpu.vector_store %arg11[%c0_69, %c0_70], %77 {strides = array<i32>} : memref<96x128xf32, #tpu.memory_space<vmem>>, vector<16x128xf32>,
    %cst_71 = arith.constant 0.000000e+00 : f32
    %79 = vector.broadcast %cst_71 : f32 to vector<16x128xf32>
    %c80 = arith.constant 80 : index
    %c0_72 = arith.constant 0 : index
    %80 = vector.load %arg11[%c80, %c0_72] : memref<96x128xf32, #tpu.memory_space<vmem>>, vector<16x128xf32>
    tpu.vector_store %arg11[%c80, %c0_72], %79 {strides = array<i32>} : memref<96x128xf32, #tpu.memory_space<vmem>>, vector<16x128xf32>,
    %c16_73 = arith.constant 16 : index
    %c0_74 = arith.constant 0 : index
    %81 = vector.load %arg11[%c16_73, %c0_74] : memref<96x128xf32, #tpu.memory_space<vmem>>, vector<64x128xf32>
    tpu.vector_store %arg11[%c16_73, %c0_74], %76 {strides = array<i32>} : memref<96x128xf32, #tpu.memory_space<vmem>>, vector<64x128xf32>,
    %c0_75 = arith.constant 0 : index
    %c0_76 = arith.constant 0 : index
    %c16_77 = arith.constant 16 : index
    %c0_78 = arith.constant 0 : index
    %82 = vector.load %arg1[%c0_75, %c0_76, %c16_77, %c0_78] : memref<1x4x96x8xf32, #tpu.memory_space<vmem>>, vector<1x1x64x8xf32>
    %83 = vector.shape_cast %82 : vector<1x1x64x8xf32> to vector<64x8xf32>
    %84 = arith.truncf %83 : vector<64x8xf32> to vector<64x8xbf16>
    %c0_79 = arith.constant 0 : index
    %c0_80 = arith.constant 0 : index
    %85 = vector.load %arg6[%c0_79, %c0_80] : memref<8x128xbf16, #tpu.memory_space<vmem>>, vector<8x128xbf16>
    %cst_81 = arith.constant dense<0.000000e+00> : vector<64x128xf32>
    %86 = tpu.matmul %84, %85, %cst_81 {dimension_numbers = #tpu.dot_dimension_numbers<[1], [0], [0], [1], [0, 0, 1, 1], [], []>} : vector<64x8xbf16>, vector<8x128xbf16>, vector<64x128xf32> -> vector<64x128xf32>
    %c0_82 = arith.constant 0 : index
    %c0_83 = arith.constant 0 : index
    %87 = vector.load %arg7[%c0_82, %c0_83] : memref<1x128xf32, #tpu.memory_space<vmem>>, vector<1x128xf32>
    %88 = vector.broadcast %87 : vector<1x128xf32> to vector<64x128xf32>
    %89 = arith.addf %86, %88 : vector<64x128xf32>
    %c0_84 = arith.constant 0 : index
    %c0_85 = arith.constant 0 : index
    %90 = vector.load %arg5[%c0_84, %c0_85] : memref<1x128xf32, #tpu.memory_space<vmem>>, vector<1x128xf32>
    %91 = vector.broadcast %90 : vector<1x128xf32> to vector<64x128xf32>
    %92 = arith.addf %89, %91 : vector<64x128xf32>
    %c7_86 = arith.constant 7 : index
    %c0_87 = arith.constant 0 : index
    %93 = vector.load %arg11[%c7_86, %c0_87] : memref<96x128xf32, #tpu.memory_space<vmem>>, vector<64x128xf32>
    %94 = vector.broadcast %0 : vector<64x1xf32> to vector<64x128xf32>
    %95 = arith.mulf %93, %94 : vector<64x128xf32>
    %96 = arith.truncf %95 : vector<64x128xf32> to vector<64x128xbf16>
    %c0_88 = arith.constant 0 : index
    %c0_89 = arith.constant 0 : index
    %c0_90 = arith.constant 0 : index
    %97 = vector.load %arg4[%c0_88, %c0_89, %c0_90] : memref<9x128x128xbf16, #tpu.memory_space<vmem>>, vector<1x128x128xbf16>
    %98 = vector.shape_cast %97 : vector<1x128x128xbf16> to vector<128x128xbf16>
    %cst_91 = arith.constant dense<0.000000e+00> : vector<64x128xf32>
    %99 = tpu.matmul %96, %98, %cst_91 {dimension_numbers = #tpu.dot_dimension_numbers<[1], [0], [0], [1], [0, 0, 1, 1], [], []>} : vector<64x128xbf16>, vector<128x128xbf16>, vector<64x128xf32> -> vector<64x128xf32>
    %100 = arith.addf %92, %99 : vector<64x128xf32>
    %c8_92 = arith.constant 8 : index
    %c0_93 = arith.constant 0 : index
    %101 = vector.load %arg11[%c8_92, %c0_93] : memref<96x128xf32, #tpu.memory_space<vmem>>, vector<64x128xf32>
    %102 = arith.truncf %101 : vector<64x128xf32> to vector<64x128xbf16>
    %c1_94 = arith.constant 1 : index
    %c0_95 = arith.constant 0 : index
    %c0_96 = arith.constant 0 : index
    %103 = vector.load %arg4[%c1_94, %c0_95, %c0_96] : memref<9x128x128xbf16, #tpu.memory_space<vmem>>, vector<1x128x128xbf16>
    %104 = vector.shape_cast %103 : vector<1x128x128xbf16> to vector<128x128xbf16>
    %cst_97 = arith.constant dense<0.000000e+00> : vector<64x128xf32>
    %105 = tpu.matmul %102, %104, %cst_97 {dimension_numbers = #tpu.dot_dimension_numbers<[1], [0], [0], [1], [0, 0, 1, 1], [], []>} : vector<64x128xbf16>, vector<128x128xbf16>, vector<64x128xf32> -> vector<64x128xf32>
    %106 = arith.addf %100, %105 : vector<64x128xf32>
    %c9 = arith.constant 9 : index
    %c0_98 = arith.constant 0 : index
    %107 = vector.load %arg11[%c9, %c0_98] : memref<96x128xf32, #tpu.memory_space<vmem>>, vector<64x128xf32>
    %108 = vector.broadcast %1 : vector<64x1xf32> to vector<64x128xf32>
    %109 = arith.mulf %107, %108 : vector<64x128xf32>
    %110 = arith.truncf %109 : vector<64x128xf32> to vector<64x128xbf16>
    %c2_99 = arith.constant 2 : index
    %c0_100 = arith.constant 0 : index
    %c0_101 = arith.constant 0 : index
    %111 = vector.load %arg4[%c2_99, %c0_100, %c0_101] : memref<9x128x128xbf16, #tpu.memory_space<vmem>>, vector<1x128x128xbf16>
    %112 = vector.shape_cast %111 : vector<1x128x128xbf16> to vector<128x128xbf16>
    %cst_102 = arith.constant dense<0.000000e+00> : vector<64x128xf32>
    %113 = tpu.matmul %110, %112, %cst_102 {dimension_numbers = #tpu.dot_dimension_numbers<[1], [0], [0], [1], [0, 0, 1, 1], [], []>} : vector<64x128xbf16>, vector<128x128xbf16>, vector<64x128xf32> -> vector<64x128xf32>
    %114 = arith.addf %106, %113 : vector<64x128xf32>
    %c15_103 = arith.constant 15 : index
    %c0_104 = arith.constant 0 : index
    %115 = vector.load %arg11[%c15_103, %c0_104] : memref<96x128xf32, #tpu.memory_space<vmem>>, vector<64x128xf32>
    %116 = vector.broadcast %0 : vector<64x1xf32> to vector<64x128xf32>
    %117 = arith.mulf %115, %116 : vector<64x128xf32>
    %118 = arith.truncf %117 : vector<64x128xf32> to vector<64x128xbf16>
    %c3_105 = arith.constant 3 : index
    %c0_106 = arith.constant 0 : index
    %c0_107 = arith.constant 0 : index
    %119 = vector.load %arg4[%c3_105, %c0_106, %c0_107] : memref<9x128x128xbf16, #tpu.memory_space<vmem>>, vector<1x128x128xbf16>
    %120 = vector.shape_cast %119 : vector<1x128x128xbf16> to vector<128x128xbf16>
    %cst_108 = arith.constant dense<0.000000e+00> : vector<64x128xf32>
    %121 = tpu.matmul %118, %120, %cst_108 {dimension_numbers = #tpu.dot_dimension_numbers<[1], [0], [0], [1], [0, 0, 1, 1], [], []>} : vector<64x128xbf16>, vector<128x128xbf16>, vector<64x128xf32> -> vector<64x128xf32>
    %122 = arith.addf %114, %121 : vector<64x128xf32>
    %c16_109 = arith.constant 16 : index
    %c0_110 = arith.constant 0 : index
    %123 = vector.load %arg11[%c16_109, %c0_110] : memref<96x128xf32, #tpu.memory_space<vmem>>, vector<64x128xf32>
    %124 = arith.truncf %123 : vector<64x128xf32> to vector<64x128xbf16>
    %c4_111 = arith.constant 4 : index
    %c0_112 = arith.constant 0 : index
    %c0_113 = arith.constant 0 : index
    %125 = vector.load %arg4[%c4_111, %c0_112, %c0_113] : memref<9x128x128xbf16, #tpu.memory_space<vmem>>, vector<1x128x128xbf16>
    %126 = vector.shape_cast %125 : vector<1x128x128xbf16> to vector<128x128xbf16>
    %cst_114 = arith.constant dense<0.000000e+00> : vector<64x128xf32>
    %127 = tpu.matmul %124, %126, %cst_114 {dimension_numbers = #tpu.dot_dimension_numbers<[1], [0], [0], [1], [0, 0, 1, 1], [], []>} : vector<64x128xbf16>, vector<128x128xbf16>, vector<64x128xf32> -> vector<64x128xf32>
    %128 = arith.addf %122, %127 : vector<64x128xf32>
    %c17 = arith.constant 17 : index
    %c0_115 = arith.constant 0 : index
    %129 = vector.load %arg11[%c17, %c0_115] : memref<96x128xf32, #tpu.memory_space<vmem>>, vector<64x128xf32>
    %130 = vector.broadcast %1 : vector<64x1xf32> to vector<64x128xf32>
    %131 = arith.mulf %129, %130 : vector<64x128xf32>
    %132 = arith.truncf %131 : vector<64x128xf32> to vector<64x128xbf16>
    %c5_116 = arith.constant 5 : index
    %c0_117 = arith.constant 0 : index
    %c0_118 = arith.constant 0 : index
    %133 = vector.load %arg4[%c5_116, %c0_117, %c0_118] : memref<9x128x128xbf16, #tpu.memory_space<vmem>>, vector<1x128x128xbf16>
    %134 = vector.shape_cast %133 : vector<1x128x128xbf16> to vector<128x128xbf16>
    %cst_119 = arith.constant dense<0.000000e+00> : vector<64x128xf32>
    %135 = tpu.matmul %132, %134, %cst_119 {dimension_numbers = #tpu.dot_dimension_numbers<[1], [0], [0], [1], [0, 0, 1, 1], [], []>} : vector<64x128xbf16>, vector<128x128xbf16>, vector<64x128xf32> -> vector<64x128xf32>
    %136 = arith.addf %128, %135 : vector<64x128xf32>
    %c23 = arith.constant 23 : index
    %c0_120 = arith.constant 0 : index
    %137 = vector.load %arg11[%c23, %c0_120] : memref<96x128xf32, #tpu.memory_space<vmem>>, vector<64x128xf32>
    %138 = vector.broadcast %0 : vector<64x1xf32> to vector<64x128xf32>
    %139 = arith.mulf %137, %138 : vector<64x128xf32>
    %140 = arith.truncf %139 : vector<64x128xf32> to vector<64x128xbf16>
    %c6_121 = arith.constant 6 : index
    %c0_122 = arith.constant 0 : index
    %c0_123 = arith.constant 0 : index
    %141 = vector.load %arg4[%c6_121, %c0_122, %c0_123] : memref<9x128x128xbf16, #tpu.memory_space<vmem>>, vector<1x128x128xbf16>
    %142 = vector.shape_cast %141 : vector<1x128x128xbf16> to vector<128x128xbf16>
    %cst_124 = arith.constant dense<0.000000e+00> : vector<64x128xf32>
    %143 = tpu.matmul %140, %142, %cst_124 {dimension_numbers = #tpu.dot_dimension_numbers<[1], [0], [0], [1], [0, 0, 1, 1], [], []>} : vector<64x128xbf16>, vector<128x128xbf16>, vector<64x128xf32> -> vector<64x128xf32>
    %144 = arith.addf %136, %143 : vector<64x128xf32>
    %c24 = arith.constant 24 : index
    %c0_125 = arith.constant 0 : index
    %145 = vector.load %arg11[%c24, %c0_125] : memref<96x128xf32, #tpu.memory_space<vmem>>, vector<64x128xf32>
    %146 = arith.truncf %145 : vector<64x128xf32> to vector<64x128xbf16>
    %c7_126 = arith.constant 7 : index
    %c0_127 = arith.constant 0 : index
    %c0_128 = arith.constant 0 : index
    %147 = vector.load %arg4[%c7_126, %c0_127, %c0_128] : memref<9x128x128xbf16, #tpu.memory_space<vmem>>, vector<1x128x128xbf16>
    %148 = vector.shape_cast %147 : vector<1x128x128xbf16> to vector<128x128xbf16>
    %cst_129 = arith.constant dense<0.000000e+00> : vector<64x128xf32>
    %149 = tpu.matmul %146, %148, %cst_129 {dimension_numbers = #tpu.dot_dimension_numbers<[1], [0], [0], [1], [0, 0, 1, 1], [], []>} : vector<64x128xbf16>, vector<128x128xbf16>, vector<64x128xf32> -> vector<64x128xf32>
    %150 = arith.addf %144, %149 : vector<64x128xf32>
    %c25 = arith.constant 25 : index
    %c0_130 = arith.constant 0 : index
    %151 = vector.load %arg11[%c25, %c0_130] : memref<96x128xf32, #tpu.memory_space<vmem>>, vector<64x128xf32>
    %152 = vector.broadcast %1 : vector<64x1xf32> to vector<64x128xf32>
    %153 = arith.mulf %151, %152 : vector<64x128xf32>
    %154 = arith.truncf %153 : vector<64x128xf32> to vector<64x128xbf16>
    %c8_131 = arith.constant 8 : index
    %c0_132 = arith.constant 0 : index
    %c0_133 = arith.constant 0 : index
    %155 = vector.load %arg4[%c8_131, %c0_132, %c0_133] : memref<9x128x128xbf16, #tpu.memory_space<vmem>>, vector<1x128x128xbf16>
    %156 = vector.shape_cast %155 : vector<1x128x128xbf16> to vector<128x128xbf16>
    %cst_134 = arith.constant dense<0.000000e+00> : vector<64x128xf32>
    %157 = tpu.matmul %154, %156, %cst_134 {dimension_numbers = #tpu.dot_dimension_numbers<[1], [0], [0], [1], [0, 0, 1, 1], [], []>} : vector<64x128xbf16>, vector<128x128xbf16>, vector<64x128xf32> -> vector<64x128xf32>
    %158 = arith.addf %150, %157 : vector<64x128xf32>
    %cst_135 = arith.constant 0.000000e+00 : f32
    %159 = vector.broadcast %cst_135 : f32 to vector<64x128xf32>
    %160 = arith.maximumf %158, %159 : vector<64x128xf32>
    %c0_136 = arith.constant 0 : index
    %c0_137 = arith.constant 0 : index
    %c0_138 = arith.constant 0 : index
    %161 = vector.load %arg10[%c0_136, %c0_137, %c0_138] : memref<1x64x128xf32, #tpu.memory_space<vmem>>, vector<1x64x128xf32>
    %162 = vector.shape_cast %161 : vector<1x64x128xf32> to vector<64x128xf32>
    %163 = vector.shape_cast %160 : vector<64x128xf32> to vector<1x64x128xf32>
    tpu.vector_store %arg10[%c0_136, %c0_137, %c0_138], %163 {strides = array<i32>} : memref<1x64x128xf32, #tpu.memory_space<vmem>>, vector<1x64x128xf32>,
    return
  }
  func.func @transform_0(%arg0: i32) -> (i32, i32, i32, i32) {
    %c0_i32 = arith.constant 0 : i32
    %c0_i32_0 = arith.constant 0 : i32
    %c0_i32_1 = arith.constant 0 : i32
    %c0_i32_2 = arith.constant 0 : i32
    return %arg0, %c0_i32, %c0_i32_0, %c0_i32_1 : i32, i32, i32, i32
  }
  func.func @transform_1(%arg0: i32) -> (i32, i32, i32) {
    %c0_i32 = arith.constant 0 : i32
    %c0_i32_0 = arith.constant 0 : i32
    %c0_i32_1 = arith.constant 0 : i32
    %c0_i32_2 = arith.constant 0 : i32
    return %c0_i32, %c0_i32_0, %c0_i32_1 : i32, i32, i32
  }
  func.func @transform_2(%arg0: i32) -> (i32, i32) {
    %c0_i32 = arith.constant 0 : i32
    %c0_i32_0 = arith.constant 0 : i32
    %c0_i32_1 = arith.constant 0 : i32
    return %c0_i32, %c0_i32_0 : i32, i32
  }
  func.func @transform_3(%arg0: i32) -> (i32, i32, i32) {
    %c0_i32 = arith.constant 0 : i32
    %c0_i32_0 = arith.constant 0 : i32
    %c0_i32_1 = arith.constant 0 : i32
    %c0_i32_2 = arith.constant 0 : i32
    return %c0_i32, %c0_i32_0, %c0_i32_1 : i32, i32, i32
  }
  func.func @transform_4(%arg0: i32) -> (i32, i32) {
    %c0_i32 = arith.constant 0 : i32
    %c0_i32_0 = arith.constant 0 : i32
    %c0_i32_1 = arith.constant 0 : i32
    return %c0_i32, %c0_i32_0 : i32, i32
  }
  func.func @transform_5(%arg0: i32) -> (i32, i32) {
    %c0_i32 = arith.constant 0 : i32
    %c0_i32_0 = arith.constant 0 : i32
    %c0_i32_1 = arith.constant 0 : i32
    return %c0_i32, %c0_i32_0 : i32, i32
  }
  func.func @transform_6(%arg0: i32) -> (i32, i32) {
    %c0_i32 = arith.constant 0 : i32
    %c0_i32_0 = arith.constant 0 : i32
    %c0_i32_1 = arith.constant 0 : i32
    return %c0_i32, %c0_i32_0 : i32, i32
  }
  func.func @transform_7(%arg0: i32) -> (i32, i32) {
    %c0_i32 = arith.constant 0 : i32
    %c0_i32_0 = arith.constant 0 : i32
    %c0_i32_1 = arith.constant 0 : i32
    return %c0_i32, %c0_i32_0 : i32, i32
  }
  func.func @transform_8(%arg0: i32) -> (i32, i32) {
    %c0_i32 = arith.constant 0 : i32
    %c0_i32_0 = arith.constant 0 : i32
    %c0_i32_1 = arith.constant 0 : i32
    return %c0_i32, %c0_i32_0 : i32, i32
  }
  func.func @transform_9(%arg0: i32) -> (i32, i32, i32) {
    %c0_i32 = arith.constant 0 : i32
    %c0_i32_0 = arith.constant 0 : i32
    %c0_i32_1 = arith.constant 0 : i32
    return %arg0, %c0_i32, %c0_i32_0 : i32, i32, i32
  }
}

</mosaic_0001>

<llo_original>
// kernel: basic_block_forward.1
$region0: #{basic_block_forward.1}
  #allocation0 [shape = 'u32[]', space=smem, size = 0x4, offset = 0x4, fixed_abs, tag = 'smem constant byte address 0x4 - core index']
  #allocation1 [shape = 'u32[72,128]{1,0:T(1,128)}', space=vmem, size = 0x9000, scoped, tag = 'internal scratch']
  #allocation2 [shape = 'f32[96,128]{1,0:T(8,128)}', space=vmem, size = 0xc000, scoped, tag = 'scratch operand']
  %s0 = inlined_call_operand.vmem [shape: f32[2,4,96,8], index: 0, kind: input, shape index: {}]
  %s1 = inlined_call_operand.vmem [shape: bf16[9,8,128], index: 1, kind: input, shape index: {}]
  %s2 = inlined_call_operand.vmem [shape: f32[1,128], index: 2, kind: input, shape index: {}]
  %s3 = inlined_call_operand.vmem [shape: bf16[9,128,128], index: 3, kind: input, shape index: {}]
  %s4 = inlined_call_operand.vmem [shape: f32[1,128], index: 4, kind: input, shape index: {}]
  %s5 = inlined_call_operand.vmem [shape: bf16[8,128], index: 5, kind: input, shape index: {}]
  %s6 = inlined_call_operand.vmem [shape: f32[1,128], index: 6, kind: input, shape index: {}]
  %s7 = inlined_call_operand.vmem [shape: f32[64,1], index: 7, kind: input, shape index: {}]
  %s8 = inlined_call_operand.vmem [shape: f32[64,1], index: 8, kind: input, shape index: {}]
  %s9 = inlined_call_operand.vmem [shape: f32[2,64,128], index: 9, kind: output, shape index: {}]
  %s10 = sld [smem:[#allocation0]]
  $region69: #{basic_block_forward.1} parent=0
    _
  %s12 = ssub.s32 1, %s10
  %s13 = scalar_select 0, %s12, %s10
  loop: start=0, step=1, limit=4
  $region2: #{basic_block_forward.1} parent=0 // loop_pre_header
    _
  $region3: #{basic_block_forward.1} parent=0 // loop_header
    %s15 = sphi 0, %s19
    %p16 = scmp.ge.s32.totalorder %s15, 4
    %s25 = sphi 0, %s27
    %s28 = sphi 0, %s25
    %s29 = sphi 0, %s28
    %s45 = sphi 0, %s29
    %s49 = sphi 0, %s49
    %s51 = sphi 0, %s49
    %s52 = sphi 0, %s51
    %s66 = sphi 0, %s52
    %s70 = sphi 0, %s70
    %s72 = sphi 0, %s70
    %s73 = sphi 0, %s72
    %s87 = sphi 0, %s73
    %s91 = sphi 0, %s91
    %s93 = sphi 0, %s91
    %s94 = sphi 0, %s93
    %s108 = sphi 0, %s94
    %s112 = sphi 0, %s112
    %s114 = sphi 0, %s112
    %s115 = sphi 0, %s114
    %s129 = sphi 0, %s115
    %s133 = sphi 0, %s133
    %s135 = sphi 0, %s133
    %s136 = sphi 0, %s135
    %s150 = sphi 0, %s136
    %s154 = sphi 0, %s154
    %s156 = sphi 0, %s154
    %s157 = sphi 0, %s156
    %s171 = sphi 0, %s157
    %s175 = sphi 0, %s175
    %s177 = sphi 0, %s175
    %s178 = sphi 0, %s177
    %s192 = sphi 0, %s178
    %s196 = sphi 0, %s196
    %s198 = sphi 0, %s196
    %s199 = sphi 0, %s198
    %s213 = sphi 0, %s199
    %s219 = sphi 0, %s221
    %s222 = sphi 0, %s219
    %s223 = sphi 0, %s222
    %s239 = sphi 0, %s223
  $region4: #{basic_block_forward.1} parent=0 // loop_header_branch
    %18 = sbr.rel (%p16) target = $region8
  $region5: #{basic_block_forward.1} parent=0 // loop_body
    %s20 = ssub.s32 %s15, 1
    %s21 = ssub.s32 %s15, 2
    %s22 = sadd.s32 %s15, 1
    %s23 = ssub.s32 %s15, %s22
    %p24 = scmp.eq.s32.totalorder %s23, 0
    %s26 = sadd.s32 %s25, 1
    %s27 = scalar_select %p24, %s25, %s26
    %p30 = pneg %p24
    %p31 = scmp.eq.s32.totalorder %s15, 1
    %p32 = por %p30, %p31
    %p33 = scmp.ne.s32.totalorder %s25, %s28
    %p34 = scmp.eq.s32.totalorder %s15, 0
    %p35 = por %p33, %p34
    %p36 = scmp.ne.s32.totalorder %s25, %s28
    %p37 = scmp.eq.s32.totalorder %s20, 1
    %p38 = por %p36, %p37
    %p39 = scmp.ne.s32.totalorder %s28, %s29
    %p40 = scmp.eq.s32.totalorder %s20, 0
    %p41 = por %p39, %p40
    %p42 = scmp.ne.s32.totalorder %s28, %s29
    %p43 = scmp.eq.s32.totalorder %s21, 1
    %p44 = por %p42, %p43
    %p46 = scmp.ne.s32.totalorder %s29, %s45
    %p47 = scmp.eq.s32.totalorder %s21, 0
    %p48 = por %p46, %p47
    %s50 = sadd.s32 %s49, 1
    %p53 = scmp.eq.s32.totalorder %s15, 1
    %p54 = scmp.ne.s32.totalorder %s49, %s51
    %p55 = scmp.eq.s32.totalorder %s15, 0
    %p56 = por %p54, %p55
    %p57 = scmp.ne.s32.totalorder %s49, %s51
    %p58 = scmp.eq.s32.totalorder %s20, 1
    %p59 = por %p57, %p58
    %p60 = scmp.ne.s32.totalorder %s51, %s52
    %p61 = scmp.eq.s32.totalorder %s20, 0
    %p62 = por %p60, %p61
    %p63 = scmp.ne.s32.totalorder %s51, %s52
    %p64 = scmp.eq.s32.totalorder %s21, 1
    %p65 = por %p63, %p64
    %p67 = scmp.ne.s32.totalorder %s52, %s66
    %p68 = scmp.eq.s32.totalorder %s21, 0
    %p69 = por %p67, %p68
    %s71 = sadd.s32 %s70, 1
    %p74 = scmp.eq.s32.totalorder %s15, 1
    %p75 = scmp.ne.s32.totalorder %s70, %s72
    %p76 = scmp.eq.s32.totalorder %s15, 0
    %p77 = por %p75, %p76
    %p78 = scmp.ne.s32.totalorder %s70, %s72
    %p79 = scmp.eq.s32.totalorder %s20, 1
    %p80 = por %p78, %p79
    %p81 = scmp.ne.s32.totalorder %s72, %s73
    %p82 = scmp.eq.s32.totalorder %s20, 0
    %p83 = por %p81, %p82
    %p84 = scmp.ne.s32.totalorder %s72, %s73
    %p85 = scmp.eq.s32.totalorder %s21, 1
    %p86 = por %p84, %p85
    %p88 = scmp.ne.s32.totalorder %s73, %s87
    %p89 = scmp.eq.s32.totalorder %s21, 0
    %p90 = por %p88, %p89
    %s92 = sadd.s32 %s91, 1
    %p95 = scmp.eq.s32.totalorder %s15, 1
    %p96 = scmp.ne.s32.totalorder %s91, %s93
    %p97 = scmp.eq.s32.totalorder %s15, 0
    %p98 = por %p96, %p97
    %p99 = scmp.ne.s32.totalorder %s91, %s93
    %p100 = scmp.eq.s32.totalorder %s20, 1
    %p101 = por %p99, %p100
    %p102 = scmp.ne.s32.totalorder %s93, %s94
    %p103 = scmp.eq.s32.totalorder %s20, 0
    %p104 = por %p102, %p103
    %p105 = scmp.ne.s32.totalorder %s93, %s94
    %p106 = scmp.eq.s32.totalorder %s21, 1
    %p107 = por %p105, %p106
    %p109 = scmp.ne.s32.totalorder %s94, %s108
    %p110 = scmp.eq.s32.totalorder %s21, 0
    %p111 = por %p109, %p110
    %s113 = sadd.s32 %s112, 1
    %p116 = scmp.eq.s32.totalorder %s15, 1
    %p117 = scmp.ne.s32.totalorder %s112, %s114
    %p118 = scmp.eq.s32.totalorder %s15, 0
    %p119 = por %p117, %p118
    %p120 = scmp.ne.s32.totalorder %s112, %s114
    %p121 = scmp.eq.s32.totalorder %s20, 1
    %p122 = por %p120, %p121
    %p123 = scmp.ne.s32.totalorder %s114, %s115
    %p124 = scmp.eq.s32.totalorder %s20, 0
    %p125 = por %p123, %p124
    %p126 = scmp.ne.s32.totalorder %s114, %s115
    %p127 = scmp.eq.s32.totalorder %s21, 1
    %p128 = por %p126, %p127
    %p130 = scmp.ne.s32.totalorder %s115, %s129
    %p131 = scmp.eq.s32.totalorder %s21, 0
    %p132 = por %p130, %p131
    %s134 = sadd.s32 %s133, 1
    %p137 = scmp.eq.s32.totalorder %s15, 1
    %p138 = scmp.ne.s32.totalorder %s133, %s135
    %p139 = scmp.eq.s32.totalorder %s15, 0
    %p140 = por %p138, %p139
    %p141 = scmp.ne.s32.totalorder %s133, %s135
    %p142 = scmp.eq.s32.totalorder %s20, 1
    %p143 = por %p141, %p142
    %p144 = scmp.ne.s32.totalorder %s135, %s136
    %p145 = scmp.eq.s32.totalorder %s20, 0
    %p146 = por %p144, %p145
    %p147 = scmp.ne.s32.totalorder %s135, %s136
    %p148 = scmp.eq.s32.totalorder %s21, 1
    %p149 = por %p147, %p148
    %p151 = scmp.ne.s32.totalorder %s136, %s150
    %p152 = scmp.eq.s32.totalorder %s21, 0
    %p153 = por %p151, %p152
    %s155 = sadd.s32 %s154, 1
    %p158 = scmp.eq.s32.totalorder %s15, 1
    %p159 = scmp.ne.s32.totalorder %s154, %s156
    %p160 = scmp.eq.s32.totalorder %s15, 0
    %p161 = por %p159, %p160
    %p162 = scmp.ne.s32.totalorder %s154, %s156
    %p163 = scmp.eq.s32.totalorder %s20, 1
    %p164 = por %p162, %p163
    %p165 = scmp.ne.s32.totalorder %s156, %s157
    %p166 = scmp.eq.s32.totalorder %s20, 0
    %p167 = por %p165, %p166
    %p168 = scmp.ne.s32.totalorder %s156, %s157
    %p169 = scmp.eq.s32.totalorder %s21, 1
    %p170 = por %p168, %p169
    %p172 = scmp.ne.s32.totalorder %s157, %s171
    %p173 = scmp.eq.s32.totalorder %s21, 0
    %p174 = por %p172, %p173
    %s176 = sadd.s32 %s175, 1
    %p179 = scmp.eq.s32.totalorder %s15, 1
    %p180 = scmp.ne.s32.totalorder %s175, %s177
    %p181 = scmp.eq.s32.totalorder %s15, 0
    %p182 = por %p180, %p181
    %p183 = scmp.ne.s32.totalorder %s175, %s177
    %p184 = scmp.eq.s32.totalorder %s20, 1
    %p185 = por %p183, %p184
    %p186 = scmp.ne.s32.totalorder %s177, %s178
    %p187 = scmp.eq.s32.totalorder %s20, 0
    %p188 = por %p186, %p187
    %p189 = scmp.ne.s32.totalorder %s177, %s178
    %p190 = scmp.eq.s32.totalorder %s21, 1
    %p191 = por %p189, %p190
    %p193 = scmp.ne.s32.totalorder %s178, %s192
    %p194 = scmp.eq.s32.totalorder %s21, 0
    %p195 = por %p193, %p194
    %s197 = sadd.s32 %s196, 1
    %p200 = scmp.eq.s32.totalorder %s15, 1
    %p201 = scmp.ne.s32.totalorder %s196, %s198
    %p202 = scmp.eq.s32.totalorder %s15, 0
    %p203 = por %p201, %p202
    %p204 = scmp.ne.s32.totalorder %s196, %s198
    %p205 = scmp.eq.s32.totalorder %s20, 1
    %p206 = por %p204, %p205
    %p207 = scmp.ne.s32.totalorder %s198, %s199
    %p208 = scmp.eq.s32.totalorder %s20, 0
    %p209 = por %p207, %p208
    %p210 = scmp.ne.s32.totalorder %s198, %s199
    %p211 = scmp.eq.s32.totalorder %s21, 1
    %p212 = por %p210, %p211
    %p214 = scmp.ne.s32.totalorder %s199, %s213
    %p215 = scmp.eq.s32.totalorder %s21, 0
    %p216 = por %p214, %p215
    %s217 = ssub.s32 %s15, %s22
    %p218 = scmp.eq.s32.totalorder %s217, 0
    %s220 = sadd.s32 %s219, 1
    %s221 = scalar_select %p218, %s219, %s220
    %p224 = pneg %p218
    %p225 = scmp.eq.s32.totalorder %s15, 1
    %p226 = por %p224, %p225
    %p227 = scmp.ne.s32.totalorder %s219, %s222
    %p228 = scmp.eq.s32.totalorder %s15, 0
    %p229 = por %p227, %p228
    %p230 = scmp.ne.s32.totalorder %s219, %s222
    %p231 = scmp.eq.s32.totalorder %s20, 1
    %p232 = por %p230, %p231
    %p233 = scmp.ne.s32.totalorder %s222, %s223
    %p234 = scmp.eq.s32.totalorder %s20, 0
    %p235 = por %p233, %p234
    %p236 = scmp.ne.s32.totalorder %s222, %s223
    %p237 = scmp.eq.s32.totalorder %s21, 1
    %p238 = por %p236, %p237
    %p240 = scmp.ne.s32.totalorder %s223, %s239
    %p241 = scmp.eq.s32.totalorder %s21, 0
    %p242 = por %p240, %p241
    %p243 = scmp.le.s32.totalorder 1, %s15
    %p244 = scmp.lt.s32.totalorder %s15, 3
    %p245 = pnand %p243, %p244
    %p246 = pneg %p245
    // Predicated region
    $region9: #{basic_block_forward.1} parent=5 // pred_check
      _
    $region10: #{basic_block_forward.1} parent=5 // pred_check_branch
      %248 = sbr.rel (%p245) target = $region12
    $region11: #{basic_block_forward.1} parent=5 // pred_region
      %s249 = ssub.s32 %s15, 1
      // Predicated region
      $region13: #{basic_block_forward.1} parent=11 // pred_check
        %p250 = pneg %p62
      $region14: #{basic_block_forward.1} parent=11 // pred_check_branch
        %252 = sbr.rel (%p250) target = $region16
      $region15: #{basic_block_forward.1} parent=11 // pred_region
        _
      $region16: #{basic_block_forward.1} parent=11 // pred_fallthru
        _
      // Predicated region
      $region17: #{basic_block_forward.1} parent=11 // pred_check
        %p253 = pneg %p83
      $region18: #{basic_block_forward.1} parent=11 // pred_check_branch
        %255 = sbr.rel (%p253) target = $region20
      $region19: #{basic_block_forward.1} parent=11 // pred_region
        _
      $region20: #{basic_block_forward.1} parent=11 // pred_fallthru
        _
      // Predicated region
      $region21: #{basic_block_forward.1} parent=11 // pred_check
        %p256 = pneg %p104
      $region22: #{basic_block_forward.1} parent=11 // pred_check_branch
        %258 = sbr.rel (%p256) target = $region24
      $region23: #{basic_block_forward.1} parent=11 // pred_region
        _
      $region24: #{basic_block_forward.1} parent=11 // pred_fallthru
        _
      // Predicated region
      $region25: #{basic_block_forward.1} parent=11 // pred_check
        %p259 = pneg %p125
      $region26: #{basic_block_forward.1} parent=11 // pred_check_branch
        %261 = sbr.rel (%p259) target = $region28
      $region27: #{basic_block_forward.1} parent=11 // pred_region
        _
      $region28: #{basic_block_forward.1} parent=11 // pred_fallthru
        _
      // Predicated region
      $region29: #{basic_block_forward.1} parent=11 // pred_check
        %p262 = pneg %p146
      $region30: #{basic_block_forward.1} parent=11 // pred_check_branch
        %264 = sbr.rel (%p262) target = $region32
      $region31: #{basic_block_forward.1} parent=11 // pred_region
        _
      $region32: #{basic_block_forward.1} parent=11 // pred_fallthru
        _
      // Predicated region
      $region33: #{basic_block_forward.1} parent=11 // pred_check
        %p265 = pneg %p167
      $region34: #{basic_block_forward.1} parent=11 // pred_check_branch
        %267 = sbr.rel (%p265) target = $region36
      $region35: #{basic_block_forward.1} parent=11 // pred_region
        _
      $region36: #{basic_block_forward.1} parent=11 // pred_fallthru
        _
      // Predicated region
      $region37: #{basic_block_forward.1} parent=11 // pred_check
        %p268 = pneg %p188
      $region38: #{basic_block_forward.1} parent=11 // pred_check_branch
        %270 = sbr.rel (%p268) target = $region40
      $region39: #{basic_block_forward.1} parent=11 // pred_region
        _
      $region40: #{basic_block_forward.1} parent=11 // pred_fallthru
        _
      // Predicated region
      $region41: #{basic_block_forward.1} parent=11 // pred_check
        %p271 = pneg %p209
      $region42: #{basic_block_forward.1} parent=11 // pred_check_branch
        %273 = sbr.rel (%p271) target = $region44
      $region43: #{basic_block_forward.1} parent=11 // pred_region
        _
      $region44: #{basic_block_forward.1} parent=11 // pred_fallthru
        _
    $region12: #{basic_block_forward.1} parent=5 // pred_fallthru
      _
    %p274 = scmp.lt.s32.totalorder %s15, 2
    // Predicated region
    $region45: #{basic_block_forward.1} parent=5 // pred_check
      %p275 = pneg %p274
    $region46: #{basic_block_forward.1} parent=5 // pred_check_branch
      %277 = sbr.rel (%p275) target = $region48
    $region47: #{basic_block_forward.1} parent=5 // pred_region
      // Predicated region
      $region49: #{basic_block_forward.1} parent=47 // pred_check
        %p278 = pneg %p35
      $region50: #{basic_block_forward.1} parent=47 // pred_check_branch
        %280 = sbr.rel (%p278) target = $region52
      $region51: #{basic_block_forward.1} parent=47 // pred_region
        %p281 = scmp.lt.s32.totalorder %s15, 1
        %s282 = scalar_select %p281, %s15, 1
        %s283 = smul.addr %s282, 48
        %s284 = smul.addr %s283, 8
        %s285 = scalar_lea.vmem %s0, %s284
      $region52: #{basic_block_forward.1} parent=47 // pred_fallthru
        _
    $region48: #{basic_block_forward.1} parent=5 // pred_fallthru
      _
    %p286 = scmp.le.s32.totalorder 1, %s15
    %p287 = scmp.lt.s32.totalorder %s15, 3
    %p288 = pnand %p286, %p287
    %p289 = pneg %p288
    // Predicated region
    $region53: #{basic_block_forward.1} parent=5 // pred_check
      _
    $region54: #{basic_block_forward.1} parent=5 // pred_check_branch
      %291 = sbr.rel (%p288) target = $region56
    $region55: #{basic_block_forward.1} parent=5 // pred_region
      %s292 = ssub.s32 %s15, 1
      %p293 = scmp.lt.s32.totalorder %s20, 1
      %s294 = scalar_select %p293, %s20, 1
      %s295 = smul.addr %s294, 48
      %s296 = smul.addr %s295, 8
      %s297 = scalar_lea.vmem %s0, %s296
      %p298 = pneg %p41
      %p299 = pneg %p38
      %p300 = pneg %p62
      %p301 = pneg %p59
      %p302 = pneg %p83
      %p303 = pneg %p80
      %p304 = pneg %p104
      %p305 = pneg %p101
      %p306 = pneg %p125
      %p307 = pneg %p122
      %p308 = pneg %p146
      %p309 = pneg %p143
      %p310 = pneg %p167
      %p311 = pneg %p164
      %p312 = pneg %p188
      %p313 = pneg %p185
      %p314 = pneg %p209
      %p315 = pneg %p206
      %p316 = pneg %p235
      %p317 = pneg %p232
      %p318 = scmp.lt.s32.totalorder %s20, 1
      %s319 = scalar_select %p318, %s20, 1
      %s320 = smul.addr %s319, 8
      %s321 = smul.addr %s320, 8
      %s322 = scalar_lea.vmem %s9, %s321
      %p323 = scmp.lt.s32.totalorder %s20, 1
      %s324 = scalar_select %p323, %s20, 1
      %s325 = smul.addr %s324, 48
      %s326 = smul.addr %s325, 8
      %s327 = scalar_lea.vmem %s0, %s326
      %p328 = scmp.lt.s32.totalorder %s20, 1
      %s329 = scalar_select %p328, %s20, 1
      %s330 = smul.addr %s329, 8
      %s331 = smul.addr %s330, 8
      %s332 = scalar_lea.vmem %s9, %s331
      %v334 = vld [vmem:[%s7] sm:$0xff]
      %v335 = vld [vmem:[%s7 + $0x8] sm:$0xff]
      %v336 = vld [vmem:[%s7 + $0x10] sm:$0xff]
      %v337 = vld [vmem:[%s7 + $0x18] sm:$0xff]
      %v338 = vld [vmem:[%s7 + $0x20] sm:$0xff]
      %v339 = vld [vmem:[%s7 + $0x28] sm:$0xff]
      %v340 = vld [vmem:[%s7 + $0x30] sm:$0xff]
      %v341 = vld [vmem:[%s7 + $0x38] sm:$0xff]
      %v342 = vld [vmem:[%s8] sm:$0xff]
      %v343 = vld [vmem:[%s8 + $0x8] sm:$0xff]
      %v344 = vld [vmem:[%s8 + $0x10] sm:$0xff]
      %v345 = vld [vmem:[%s8 + $0x18] sm:$0xff]
      %v346 = vld [vmem:[%s8 + $0x20] sm:$0xff]
      %v347 = vld [vmem:[%s8 + $0x28] sm:$0xff]
      %v348 = vld [vmem:[%s8 + $0x30] sm:$0xff]
      %v349 = vld [vmem:[%s8 + $0x38] sm:$0xff]
      %s350 = scalar_lea.vmem %s327, 288
      %v351 = vld [vmem:[%s350 + $0x7] sm:$0xff]
      %v352 = vld [vmem:[%s350 + $0xf] sm:$0xff]
      %v353 = vld [vmem:[%s350 + $0x17] sm:$0xff]
      %v354 = vld [vmem:[%s350 + $0x1f] sm:$0xff]
      %v355 = vld [vmem:[%s350 + $0x27] sm:$0xff]
      %v356 = vld [vmem:[%s350 + $0x2f] sm:$0xff]
      %v357 = vld [vmem:[%s350 + $0x37] sm:$0xff]
      %v358 = vld [vmem:[%s350 + $0x3f] sm:$0xff]
      %360 = vset.pattern.permute.xlu0 0
      %361 = vperm.xlu0 %360, %v334
      %v362 = vpop.permute.xlu0 %361
      %365 = vset.pattern.permute.xlu0 0
      %366 = vperm.xlu0 %365, %v335
      %v367 = vpop.permute.xlu0 %366
      %370 = vset.pattern.permute.xlu0 0
      %371 = vperm.xlu0 %370, %v336
      %v372 = vpop.permute.xlu0 %371
      %375 = vset.pattern.permute.xlu0 0
      %376 = vperm.xlu0 %375, %v337
      %v377 = vpop.permute.xlu0 %376
      %380 = vset.pattern.permute.xlu0 0
      %381 = vperm.xlu0 %380, %v338
      %v382 = vpop.permute.xlu0 %381
      %385 = vset.pattern.permute.xlu0 0
      %386 = vperm.xlu0 %385, %v339
      %v387 = vpop.permute.xlu0 %386
      %390 = vset.pattern.permute.xlu0 0
      %391 = vperm.xlu0 %390, %v340
      %v392 = vpop.permute.xlu0 %391
      %395 = vset.pattern.permute.xlu0 0
      %396 = vperm.xlu0 %395, %v341
      %v397 = vpop.permute.xlu0 %396
      %v399 = vmul.f32 %v351, %v362
      %v400 = vmul.f32 %v352, %v367
      %v401 = vmul.f32 %v353, %v372
      %v402 = vmul.f32 %v354, %v377
      %v403 = vmul.f32 %v355, %v382
      %v404 = vmul.f32 %v356, %v387
      %v405 = vmul.f32 %v357, %v392
      %v406 = vmul.f32 %v358, %v397
      %v407 = vpack.c.bf16 %v400, %v399
      %v408 = vpack.c.bf16 %v402, %v401
      %v409 = vpack.c.bf16 %v404, %v403
      %v410 = vpack.c.bf16 %v406, %v405
      %v411 = vld [vmem:[%s1] sm:$0xf]
      %s412 = scalar_lea.vmem %s327, 192
      %v413 = vld [vmem:[%s412 + $0x8] sm:$0xff]
      %v414 = vld [vmem:[%s412 + $0x10] sm:$0xff]
      %v415 = vld [vmem:[%s412 + $0x18] sm:$0xff]
      %v416 = vld [vmem:[%s412 + $0x20] sm:$0xff]
      %v417 = vld [vmem:[%s412 + $0x28] sm:$0xff]
      %v418 = vld [vmem:[%s412 + $0x30] sm:$0xff]
      %v419 = vld [vmem:[%s412 + $0x38] sm:$0xff]
      %v420 = vld [vmem:[%s412 + $0x40] sm:$0xff]
      %v421 = vpack.c.bf16 %v414, %v413
      %v422 = vpack.c.bf16 %v416, %v415
      %v423 = vpack.c.bf16 %v418, %v417
      %v424 = vpack.c.bf16 %v420, %v419
      %s425 = scalar_lea.vmem %s1, 4
      %v426 = vld [vmem:[%s425] sm:$0xf]
      %vm427 = vcmask 64512
      %v429 = vsel %vm427, %v421, 0
      %v432 = vsel %vm427, %v422, 0
      %v435 = vsel %vm427, %v423, 0
      %v438 = vsel %vm427, %v424, 0
      %vm440 = vcmask 1043456
      %v442 = vsel %vm440, %v426, 0
      %444 = vmatpush.bf16.msra.mxu0 0
      %445 = vmatpush.bf16.msra.mxu0 0
      %446 = vmatpush.bf16.msra.mxu0 0
      %447 = vmatpush.bf16.msra.mxu0 0
      %448 = vmatpush.bf16.msra.mxu0 0
      %449 = vmatpush.bf16.msra.mxu0 0
      %450 = vmatpush.bf16.msra.mxu0 0
      %451 = vmatpush.bf16.msra.mxu0 %v442
      %452 = vmatmul.bf16.gmra.mxu0 %v429
      %v453 = vpop.f32.mrf.mxu0
      %v454 = vadd.f32 0.0, %v453
      %v455 = vpop.f32.mrf.mxu0
      %v456 = vadd.f32 0.0, %v455
      %457 = vmatmul.bf16.gmra.mxu0 %v432
      %v458 = vpop.f32.mrf.mxu0
      %v459 = vadd.f32 0.0, %v458
      %v460 = vpop.f32.mrf.mxu0
      %v461 = vadd.f32 0.0, %v460
      %462 = vmatmul.bf16.gmra.mxu0 %v435
      %v463 = vpop.f32.mrf.mxu0
      %v464 = vadd.f32 0.0, %v463
      %v465 = vpop.f32.mrf.mxu0
      %v466 = vadd.f32 0.0, %v465
      %467 = vmatmul.bf16.gmra.mxu0 %v438
      %v468 = vpop.f32.mrf.mxu0
      %v469 = vadd.f32 0.0, %v468
      %v470 = vpop.f32.mrf.mxu0
      %v471 = vadd.f32 0.0, %v470
      %472 = vdwg.mxu0
      %v474 = vsel %vm427, %v407, 0
      %v477 = vsel %vm427, %v408, 0
      %v480 = vsel %vm427, %v409, 0
      %v483 = vsel %vm427, %v410, 0
      %v486 = vsel %vm440, %v411, 0
      %488 = vmatpush.bf16.msra.mxu0 0
      %489 = vmatpush.bf16.msra.mxu0 0
      %490 = vmatpush.bf16.msra.mxu0 0
      %491 = vmatpush.bf16.msra.mxu0 0
      %492 = vmatpush.bf16.msra.mxu0 0
      %493 = vmatpush.bf16.msra.mxu0 0
      %494 = vmatpush.bf16.msra.mxu0 0
      %495 = vmatpush.bf16.msra.mxu0 %v486
      %496 = vmatmul.bf16.gmra.mxu0 %v474
      %v497 = vpop.f32.mrf.mxu0
      %v498 = vadd.f32 %v454, %v497
      %v499 = vpop.f32.mrf.mxu0
      %v500 = vadd.f32 %v456, %v499
      %501 = vmatmul.bf16.gmra.mxu0 %v477
      %v502 = vpop.f32.mrf.mxu0
      %v503 = vadd.f32 %v459, %v502
      %v504 = vpop.f32.mrf.mxu0
      %v505 = vadd.f32 %v461, %v504
      %506 = vmatmul.bf16.gmra.mxu0 %v480
      %v507 = vpop.f32.mrf.mxu0
      %v508 = vadd.f32 %v464, %v507
      %v509 = vpop.f32.mrf.mxu0
      %v510 = vadd.f32 %v466, %v509
      %511 = vmatmul.bf16.gmra.mxu0 %v483
      %v512 = vpop.f32.mrf.mxu0
      %v513 = vadd.f32 %v469, %v512
      %v514 = vpop.f32.mrf.mxu0
      %v515 = vadd.f32 %v471, %v514
      %516 = vdwg.mxu0
      %v517 = vld [vmem:[%s350 + $0x8] sm:$0xff]
      %v518 = vld [vmem:[%s350 + $0x10] sm:$0xff]
      %v519 = vld [vmem:[%s350 + $0x18] sm:$0xff]
      %v520 = vld [vmem:[%s350 + $0x20] sm:$0xff]
      %v521 = vld [vmem:[%s350 + $0x28] sm:$0xff]
      %v522 = vld [vmem:[%s350 + $0x30] sm:$0xff]
      %v523 = vld [vmem:[%s350 + $0x38] sm:$0xff]
      %v524 = vld [vmem:[%s350 + $0x40] sm:$0xff]
      %v525 = vpack.c.bf16 %v518, %v517
      %v526 = vpack.c.bf16 %v520, %v519
      %v527 = vpack.c.bf16 %v522, %v521
      %v528 = vpack.c.bf16 %v524, %v523
      %s529 = scalar_lea.vmem %s1, 8
      %v530 = vld [vmem:[%s529] sm:$0xf]
      %v532 = vsel %vm427, %v525, 0
      %v535 = vsel %vm427, %v526, 0
      %v538 = vsel %vm427, %v527, 0
      %v541 = vsel %vm427, %v528, 0
      %v544 = vsel %vm440, %v530, 0
      %546 = vmatpush.bf16.msra.mxu0 0
      %547 = vmatpush.bf16.msra.mxu0 0
      %548 = vmatpush.bf16.msra.mxu0 0
      %549 = vmatpush.bf16.msra.mxu0 0
      %550 = vmatpush.bf16.msra.mxu0 0
      %551 = vmatpush.bf16.msra.mxu0 0
      %552 = vmatpush.bf16.msra.mxu0 0
      %553 = vmatpush.bf16.msra.mxu0 %v544
      %554 = vmatmul.bf16.gmra.mxu0 %v532
      %v555 = vpop.f32.mrf.mxu0
      %v556 = vadd.f32 0.0, %v555
      %v557 = vpop.f32.mrf.mxu0
      %v558 = vadd.f32 0.0, %v557
      %559 = vmatmul.bf16.gmra.mxu0 %v535
      %v560 = vpop.f32.mrf.mxu0
      %v561 = vadd.f32 0.0, %v560
      %v562 = vpop.f32.mrf.mxu0
      %v563 = vadd.f32 0.0, %v562
      %564 = vmatmul.bf16.gmra.mxu0 %v538
      %v565 = vpop.f32.mrf.mxu0
      %v566 = vadd.f32 0.0, %v565
      %v567 = vpop.f32.mrf.mxu0
      %v568 = vadd.f32 0.0, %v567
      %569 = vmatmul.bf16.gmra.mxu0 %v541
      %v570 = vpop.f32.mrf.mxu0
      %v571 = vadd.f32 0.0, %v570
      %v572 = vpop.f32.mrf.mxu0
      %v573 = vadd.f32 0.0, %v572
      %574 = vdwg.mxu0
      %v575 = vadd.f32 %v498, %v556
      %v576 = vadd.f32 %v500, %v558
      %v577 = vadd.f32 %v503, %v561
      %v578 = vadd.f32 %v505, %v563
      %v579 = vadd.f32 %v508, %v566
      %v580 = vadd.f32 %v510, %v568
      %v581 = vadd.f32 %v513, %v571
      %v582 = vadd.f32 %v515, %v573
      %s583 = scalar_lea.vmem %s327, 96
      %v584 = vld [vmem:[%s583 + $0xf] sm:$0xff]
      %v585 = vld [vmem:[%s583 + $0x17] sm:$0xff]
      %v586 = vld [vmem:[%s583 + $0x1f] sm:$0xff]
      %v587 = vld [vmem:[%s583 + $0x27] sm:$0xff]
      %v588 = vld [vmem:[%s583 + $0x2f] sm:$0xff]
      %v589 = vld [vmem:[%s583 + $0x37] sm:$0xff]
      %v590 = vld [vmem:[%s583 + $0x3f] sm:$0xff]
      %v591 = vld [vmem:[%s583 + $0x47] sm:$0xff]
      %v592 = vmul.f32 %v584, %v362
      %v593 = vmul.f32 %v585, %v367
      %v594 = vmul.f32 %v586, %v372
      %v595 = vmul.f32 %v587, %v377
      %v596 = vmul.f32 %v588, %v382
      %v597 = vmul.f32 %v589, %v387
      %v598 = vmul.f32 %v590, %v392
      %v599 = vmul.f32 %v591, %v397
      %v600 = vpack.c.bf16 %v593, %v592
      %v601 = vpack.c.bf16 %v595, %v594
      %v602 = vpack.c.bf16 %v597, %v596
      %v603 = vpack.c.bf16 %v599, %v598
      %s604 = scalar_lea.vmem %s1, 12
      %v605 = vld [vmem:[%s604] sm:$0xf]
      %v607 = vsel %vm427, %v600, 0
      %v610 = vsel %vm427, %v601, 0
      %v613 = vsel %vm427, %v602, 0
      %v616 = vsel %vm427, %v603, 0
      %v619 = vsel %vm440, %v605, 0
      %621 = vmatpush.bf16.msra.mxu0 0
      %622 = vmatpush.bf16.msra.mxu0 0
      %623 = vmatpush.bf16.msra.mxu0 0
      %624 = vmatpush.bf16.msra.mxu0 0
      %625 = vmatpush.bf16.msra.mxu0 0
      %626 = vmatpush.bf16.msra.mxu0 0
      %627 = vmatpush.bf16.msra.mxu0 0
      %628 = vmatpush.bf16.msra.mxu0 %v619
      %629 = vmatmul.bf16.gmra.mxu0 %v607
      %v630 = vpop.f32.mrf.mxu0
      %v631 = vadd.f32 0.0, %v630
      %v632 = vpop.f32.mrf.mxu0
      %v633 = vadd.f32 0.0, %v632
      %634 = vmatmul.bf16.gmra.mxu0 %v610
      %v635 = vpop.f32.mrf.mxu0
      %v636 = vadd.f32 0.0, %v635
      %v637 = vpop.f32.mrf.mxu0
      %v638 = vadd.f32 0.0, %v637
      %639 = vmatmul.bf16.gmra.mxu0 %v613
      %v640 = vpop.f32.mrf.mxu0
      %v641 = vadd.f32 0.0, %v640
      %v642 = vpop.f32.mrf.mxu0
      %v643 = vadd.f32 0.0, %v642
      %644 = vmatmul.bf16.gmra.mxu0 %v616
      %v645 = vpop.f32.mrf.mxu0
      %v646 = vadd.f32 0.0, %v645
      %v647 = vpop.f32.mrf.mxu0
      %v648 = vadd.f32 0.0, %v647
      %649 = vdwg.mxu0
      %v650 = vadd.f32 %v575, %v631
      %v651 = vadd.f32 %v576, %v633
      %v652 = vadd.f32 %v577, %v636
      %v653 = vadd.f32 %v578, %v638
      %v654 = vadd.f32 %v579, %v641
      %v655 = vadd.f32 %v580, %v643
      %v656 = vadd.f32 %v581, %v646
      %v657 = vadd.f32 %v582, %v648
      %v658 = vld [vmem:[%s327 + $0x10] sm:$0xff]
      %v659 = vld [vmem:[%s327 + $0x18] sm:$0xff]
      %v660 = vld [vmem:[%s327 + $0x20] sm:$0xff]
      %v661 = vld [vmem:[%s327 + $0x28] sm:$0xff]
      %v662 = vld [vmem:[%s327 + $0x30] sm:$0xff]
      %v663 = vld [vmem:[%s327 + $0x38] sm:$0xff]
      %v664 = vld [vmem:[%s327 + $0x40] sm:$0xff]
      %v665 = vld [vmem:[%s327 + $0x48] sm:$0xff]
      %v666 = vpack.c.bf16 %v659, %v658
      %v667 = vpack.c.bf16 %v661, %v660
      %v668 = vpack.c.bf16 %v663, %v662
      %v669 = vpack.c.bf16 %v665, %v664
      %s670 = scalar_lea.vmem %s1, 16
      %v671 = vld [vmem:[%s670] sm:$0xf]
      %v673 = vsel %vm427, %v666, 0
      %v676 = vsel %vm427, %v667, 0
      %v679 = vsel %vm427, %v668, 0
      %v682 = vsel %vm427, %v669, 0
      %v685 = vsel %vm440, %v671, 0
      %687 = vmatpush.bf16.msra.mxu0 0
      %688 = vmatpush.bf16.msra.mxu0 0
      %689 = vmatpush.bf16.msra.mxu0 0
      %690 = vmatpush.bf16.msra.mxu0 0
      %691 = vmatpush.bf16.msra.mxu0 0
      %692 = vmatpush.bf16.msra.mxu0 0
      %693 = vmatpush.bf16.msra.mxu0 0
      %694 = vmatpush.bf16.msra.mxu0 %v685
      %695 = vmatmul.bf16.gmra.mxu0 %v673
      %v696 = vpop.f32.mrf.mxu0
      %v697 = vadd.f32 0.0, %v696
      %v698 = vpop.f32.mrf.mxu0
      %v699 = vadd.f32 0.0, %v698
      %700 = vmatmul.bf16.gmra.mxu0 %v676
      %v701 = vpop.f32.mrf.mxu0
      %v702 = vadd.f32 0.0, %v701
      %v703 = vpop.f32.mrf.mxu0
      %v704 = vadd.f32 0.0, %v703
      %705 = vmatmul.bf16.gmra.mxu0 %v679
      %v706 = vpop.f32.mrf.mxu0
      %v707 = vadd.f32 0.0, %v706
      %v708 = vpop.f32.mrf.mxu0
      %v709 = vadd.f32 0.0, %v708
      %710 = vmatmul.bf16.gmra.mxu0 %v682
      %v711 = vpop.f32.mrf.mxu0
      %v712 = vadd.f32 0.0, %v711
      %v713 = vpop.f32.mrf.mxu0
      %v714 = vadd.f32 0.0, %v713
      %715 = vdwg.mxu0
      %v716 = vadd.f32 %v650, %v697
      %v717 = vadd.f32 %v651, %v699
      %v718 = vadd.f32 %v652, %v702
      %v719 = vadd.f32 %v653, %v704
      %v720 = vadd.f32 %v654, %v707
      %v721 = vadd.f32 %v655, %v709
      %v722 = vadd.f32 %v656, %v712
      %v723 = vadd.f32 %v657, %v714
      %v724 = vld [vmem:[%s583 + $0x10] sm:$0xff]
      %v725 = vld [vmem:[%s583 + $0x18] sm:$0xff]
      %v726 = vld [vmem:[%s583 + $0x20] sm:$0xff]
      %v727 = vld [vmem:[%s583 + $0x28] sm:$0xff]
      %v728 = vld [vmem:[%s583 + $0x30] sm:$0xff]
      %v729 = vld [vmem:[%s583 + $0x38] sm:$0xff]
      %v730 = vld [vmem:[%s583 + $0x40] sm:$0xff]
      %v731 = vld [vmem:[%s583 + $0x48] sm:$0xff]
      %v732 = vpack.c.bf16 %v725, %v724
      %v733 = vpack.c.bf16 %v727, %v726
      %v734 = vpack.c.bf16 %v729, %v728
      %v735 = vpack.c.bf16 %v731, %v730
      %s736 = scalar_lea.vmem %s1, 20
      %v737 = vld [vmem:[%s736] sm:$0xf]
      %v739 = vsel %vm427, %v732, 0
      %v742 = vsel %vm427, %v733, 0
      %v745 = vsel %vm427, %v734, 0
      %v748 = vsel %vm427, %v735, 0
      %v751 = vsel %vm440, %v737, 0
      %753 = vmatpush.bf16.msra.mxu0 0
      %754 = vmatpush.bf16.msra.mxu0 0
      %755 = vmatpush.bf16.msra.mxu0 0
      %756 = vmatpush.bf16.msra.mxu0 0
      %757 = vmatpush.bf16.msra.mxu0 0
      %758 = vmatpush.bf16.msra.mxu0 0
      %759 = vmatpush.bf16.msra.mxu0 0
      %760 = vmatpush.bf16.msra.mxu0 %v751
      %761 = vmatmul.bf16.gmra.mxu0 %v739
      %v762 = vpop.f32.mrf.mxu0
      %v763 = vadd.f32 0.0, %v762
      %v764 = vpop.f32.mrf.mxu0
      %v765 = vadd.f32 0.0, %v764
      %766 = vmatmul.bf16.gmra.mxu0 %v742
      %v767 = vpop.f32.mrf.mxu0
      %v768 = vadd.f32 0.0, %v767
      %v769 = vpop.f32.mrf.mxu0
      %v770 = vadd.f32 0.0, %v769
      %771 = vmatmul.bf16.gmra.mxu0 %v745
      %v772 = vpop.f32.mrf.mxu0
      %v773 = vadd.f32 0.0, %v772
      %v774 = vpop.f32.mrf.mxu0
      %v775 = vadd.f32 0.0, %v774
      %776 = vmatmul.bf16.gmra.mxu0 %v748
      %v777 = vpop.f32.mrf.mxu0
      %v778 = vadd.f32 0.0, %v777
      %v779 = vpop.f32.mrf.mxu0
      %v780 = vadd.f32 0.0, %v779
      %781 = vdwg.mxu0
      %v782 = vadd.f32 %v716, %v763
      %v783 = vadd.f32 %v717, %v765
      %v784 = vadd.f32 %v718, %v768
      %v785 = vadd.f32 %v719, %v770
      %v786 = vadd.f32 %v720, %v773
      %v787 = vadd.f32 %v721, %v775
      %v788 = vadd.f32 %v722, %v778
      %v789 = vadd.f32 %v723, %v780
      %v790 = vld [vmem:[%s350 + $0xf] sm:$0xff]
      %v791 = vld [vmem:[%s350 + $0x17] sm:$0xff]
      %v792 = vld [vmem:[%s350 + $0x1f] sm:$0xff]
      %v793 = vld [vmem:[%s350 + $0x27] sm:$0xff]
      %v794 = vld [vmem:[%s350 + $0x2f] sm:$0xff]
      %v795 = vld [vmem:[%s350 + $0x37] sm:$0xff]
      %v796 = vld [vmem:[%s350 + $0x3f] sm:$0xff]
      %v797 = vld [vmem:[%s350 + $0x47] sm:$0xff]
      %v798 = vmul.f32 %v790, %v362
      %v799 = vmul.f32 %v791, %v367
      %v800 = vmul.f32 %v792, %v372
      %v801 = vmul.f32 %v793, %v377
      %v802 = vmul.f32 %v794, %v382
      %v803 = vmul.f32 %v795, %v387
      %v804 = vmul.f32 %v796, %v392
      %v805 = vmul.f32 %v797, %v397
      %v806 = vpack.c.bf16 %v799, %v798
      %v807 = vpack.c.bf16 %v801, %v800
      %v808 = vpack.c.bf16 %v803, %v802
      %v809 = vpack.c.bf16 %v805, %v804
      %s810 = scalar_lea.vmem %s1, 24
      %v811 = vld [vmem:[%s810] sm:$0xf]
      %v813 = vsel %vm427, %v806, 0
      %v816 = vsel %vm427, %v807, 0
      %v819 = vsel %vm427, %v808, 0
      %v822 = vsel %vm427, %v809, 0
      %v825 = vsel %vm440, %v811, 0
      %827 = vmatpush.bf16.msra.mxu0 0
      %828 = vmatpush.bf16.msra.mxu0 0
      %829 = vmatpush.bf16.msra.mxu0 0
      %830 = vmatpush.bf16.msra.mxu0 0
      %831 = vmatpush.bf16.msra.mxu0 0
      %832 = vmatpush.bf16.msra.mxu0 0
      %833 = vmatpush.bf16.msra.mxu0 0
      %834 = vmatpush.bf16.msra.mxu0 %v825
      %835 = vmatmul.bf16.gmra.mxu0 %v813
      %v836 = vpop.f32.mrf.mxu0
      %v837 = vadd.f32 0.0, %v836
      %v838 = vpop.f32.mrf.mxu0
      %v839 = vadd.f32 0.0, %v838
      %840 = vmatmul.bf16.gmra.mxu0 %v816
      %v841 = vpop.f32.mrf.mxu0
      %v842 = vadd.f32 0.0, %v841
      %v843 = vpop.f32.mrf.mxu0
      %v844 = vadd.f32 0.0, %v843
      %845 = vmatmul.bf16.gmra.mxu0 %v819
      %v846 = vpop.f32.mrf.mxu0
      %v847 = vadd.f32 0.0, %v846
      %v848 = vpop.f32.mrf.mxu0
      %v849 = vadd.f32 0.0, %v848
      %850 = vmatmul.bf16.gmra.mxu0 %v822
      %v851 = vpop.f32.mrf.mxu0
      %v852 = vadd.f32 0.0, %v851
      %v853 = vpop.f32.mrf.mxu0
      %v854 = vadd.f32 0.0, %v853
      %855 = vdwg.mxu0
      %v856 = vadd.f32 %v782, %v837
      %v857 = vadd.f32 %v783, %v839
      %v858 = vadd.f32 %v784, %v842
      %v859 = vadd.f32 %v785, %v844
      %v860 = vadd.f32 %v786, %v847
      %v861 = vadd.f32 %v787, %v849
      %v862 = vadd.f32 %v788, %v852
      %v863 = vadd.f32 %v789, %v854
      %v864 = vld [vmem:[%s412 + $0x10] sm:$0xff]
      %v865 = vld [vmem:[%s412 + $0x18] sm:$0xff]
      %v866 = vld [vmem:[%s412 + $0x20] sm:$0xff]
      %v867 = vld [vmem:[%s412 + $0x28] sm:$0xff]
      %v868 = vld [vmem:[%s412 + $0x30] sm:$0xff]
      %v869 = vld [vmem:[%s412 + $0x38] sm:$0xff]
      %v870 = vld [vmem:[%s412 + $0x40] sm:$0xff]
      %v871 = vld [vmem:[%s412 + $0x48] sm:$0xff]
      %v872 = vpack.c.bf16 %v865, %v864
      %v873 = vpack.c.bf16 %v867, %v866
      %v874 = vpack.c.bf16 %v869, %v868
      %v875 = vpack.c.bf16 %v871, %v870
      %s876 = scalar_lea.vmem %s1, 28
      %v877 = vld [vmem:[%s876] sm:$0xf]
      %v879 = vsel %vm427, %v872, 0
      %v882 = vsel %vm427, %v873, 0
      %v885 = vsel %vm427, %v874, 0
      %v888 = vsel %vm427, %v875, 0
      %v891 = vsel %vm440, %v877, 0
      %893 = vmatpush.bf16.msra.mxu0 0
      %894 = vmatpush.bf16.msra.mxu0 0
      %895 = vmatpush.bf16.msra.mxu0 0
      %896 = vmatpush.bf16.msra.mxu0 0
      %897 = vmatpush.bf16.msra.mxu0 0
      %898 = vmatpush.bf16.msra.mxu0 0
      %899 = vmatpush.bf16.msra.mxu0 0
      %900 = vmatpush.bf16.msra.mxu0 %v891
      %901 = vmatmul.bf16.gmra.mxu0 %v879
      %v902 = vpop.f32.mrf.mxu0
      %v903 = vadd.f32 0.0, %v902
      %v904 = vpop.f32.mrf.mxu0
      %v905 = vadd.f32 0.0, %v904
      %906 = vmatmul.bf16.gmra.mxu0 %v882
      %v907 = vpop.f32.mrf.mxu0
      %v908 = vadd.f32 0.0, %v907
      %v909 = vpop.f32.mrf.mxu0
      %v910 = vadd.f32 0.0, %v909
      %911 = vmatmul.bf16.gmra.mxu0 %v885
      %v912 = vpop.f32.mrf.mxu0
      %v913 = vadd.f32 0.0, %v912
      %v914 = vpop.f32.mrf.mxu0
      %v915 = vadd.f32 0.0, %v914
      %916 = vmatmul.bf16.gmra.mxu0 %v888
      %v917 = vpop.f32.mrf.mxu0
      %v918 = vadd.f32 0.0, %v917
      %v919 = vpop.f32.mrf.mxu0
      %v920 = vadd.f32 0.0, %v919
      %921 = vdwg.mxu0
      %v922 = vadd.f32 %v856, %v903
      %v923 = vadd.f32 %v857, %v905
      %v924 = vadd.f32 %v858, %v908
      %v925 = vadd.f32 %v859, %v910
      %v926 = vadd.f32 %v860, %v913
      %v927 = vadd.f32 %v861, %v915
      %v928 = vadd.f32 %v862, %v918
      %v929 = vadd.f32 %v863, %v920
      %v930 = vld [vmem:[%s350 + $0x10] sm:$0xff]
      %v931 = vld [vmem:[%s350 + $0x18] sm:$0xff]
      %v932 = vld [vmem:[%s350 + $0x20] sm:$0xff]
      %v933 = vld [vmem:[%s350 + $0x28] sm:$0xff]
      %v934 = vld [vmem:[%s350 + $0x30] sm:$0xff]
      %v935 = vld [vmem:[%s350 + $0x38] sm:$0xff]
      %v936 = vld [vmem:[%s350 + $0x40] sm:$0xff]
      %v937 = vld [vmem:[%s350 + $0x48] sm:$0xff]
      %v938 = vpack.c.bf16 %v931, %v930
      %v939 = vpack.c.bf16 %v933, %v932
      %v940 = vpack.c.bf16 %v935, %v934
      %v941 = vpack.c.bf16 %v937, %v936
      %s942 = scalar_lea.vmem %s1, 32
      %v943 = vld [vmem:[%s942] sm:$0xf]
      %v945 = vsel %vm427, %v938, 0
      %v948 = vsel %vm427, %v939, 0
      %v951 = vsel %vm427, %v940, 0
      %v954 = vsel %vm427, %v941, 0
      %v957 = vsel %vm440, %v943, 0
      %959 = vmatpush.bf16.msra.mxu0 0
      %960 = vmatpush.bf16.msra.mxu0 0
      %961 = vmatpush.bf16.msra.mxu0 0
      %962 = vmatpush.bf16.msra.mxu0 0
      %963 = vmatpush.bf16.msra.mxu0 0
      %964 = vmatpush.bf16.msra.mxu0 0
      %965 = vmatpush.bf16.msra.mxu0 0
      %966 = vmatpush.bf16.msra.mxu0 %v957
      %967 = vmatmul.bf16.gmra.mxu0 %v945
      %v968 = vpop.f32.mrf.mxu0
      %v969 = vadd.f32 0.0, %v968
      %v970 = vpop.f32.mrf.mxu0
      %v971 = vadd.f32 0.0, %v970
      %972 = vmatmul.bf16.gmra.mxu0 %v948
      %v973 = vpop.f32.mrf.mxu0
      %v974 = vadd.f32 0.0, %v973
      %v975 = vpop.f32.mrf.mxu0
      %v976 = vadd.f32 0.0, %v975
      %977 = vmatmul.bf16.gmra.mxu0 %v951
      %v978 = vpop.f32.mrf.mxu0
      %v979 = vadd.f32 0.0, %v978
      %v980 = vpop.f32.mrf.mxu0
      %v981 = vadd.f32 0.0, %v980
      %982 = vmatmul.bf16.gmra.mxu0 %v954
      %v983 = vpop.f32.mrf.mxu0
      %v984 = vadd.f32 0.0, %v983
      %v985 = vpop.f32.mrf.mxu0
      %v986 = vadd.f32 0.0, %v985
      %987 = vdwg.mxu0
      %v988 = vadd.f32 %v922, %v969
      %v989 = vadd.f32 %v923, %v971
      %v990 = vadd.f32 %v924, %v974
      %v991 = vadd.f32 %v925, %v976
      %v992 = vadd.f32 %v926, %v979
      %v993 = vadd.f32 %v927, %v981
      %v994 = vadd.f32 %v928, %v984
      %v995 = vadd.f32 %v929, %v986
      %v996 = vld [vmem:[%s2] sm:$0x1]
      %v998 = vperm.slane %v996, 0
      %v1000 = vadd.f32 %v988, %v998
      %v1001 = vadd.f32 %v989, %v998
      %v1002 = vadd.f32 %v990, %v998
      %v1003 = vadd.f32 %v991, %v998
      %v1004 = vadd.f32 %v992, %v998
      %v1005 = vadd.f32 %v993, %v998
      %v1006 = vadd.f32 %v994, %v998
      %v1007 = vadd.f32 %v995, %v998
      %v1008 = vmax.f32 %v1000, 0.0
      %v1009 = vmax.f32 %v1001, 0.0
      %v1010 = vmax.f32 %v1002, 0.0
      %v1011 = vmax.f32 %v1003, 0.0
      %v1012 = vmax.f32 %v1004, 0.0
      %v1013 = vmax.f32 %v1005, 0.0
      %v1014 = vmax.f32 %v1006, 0.0
      %v1015 = vmax.f32 %v1007, 0.0
      %1016 = vst [vmem:[#allocation2] sm:$0xff] 0.0
      %1017 = vst [vmem:[#allocation2 + $0x8] sm:$0xff] 0.0
      %1018 = vst [vmem:[#allocation2 + $0x50] sm:$0xff] 0.0
      %1019 = vst [vmem:[#allocation2 + $0x58] sm:$0xff] 0.0
      %1020 = vst [vmem:[#allocation2 + $0x10] sm:$0xff] %v1008
      %1021 = vst [vmem:[#allocation2 + $0x18] sm:$0xff] %v1009
      %1022 = vst [vmem:[#allocation2 + $0x20] sm:$0xff] %v1010
      %1023 = vst [vmem:[#allocation2 + $0x28] sm:$0xff] %v1011
      %1024 = vst [vmem:[#allocation2 + $0x30] sm:$0xff] %v1012
      %1025 = vst [vmem:[#allocation2 + $0x38] sm:$0xff] %v1013
      %1026 = vst [vmem:[#allocation2 + $0x40] sm:$0xff] %v1014
      %1027 = vst [vmem:[#allocation2 + $0x48] sm:$0xff] %v1015
      %v1028 = vld [vmem:[%s327 + $0x10] sm:$0xff]
      %v1029 = vld [vmem:[%s327 + $0x18] sm:$0xff]
      %v1030 = vld [vmem:[%s327 + $0x20] sm:$0xff]
      %v1031 = vld [vmem:[%s327 + $0x28] sm:$0xff]
      %v1032 = vld [vmem:[%s327 + $0x30] sm:$0xff]
      %v1033 = vld [vmem:[%s327 + $0x38] sm:$0xff]
      %v1034 = vld [vmem:[%s327 + $0x40] sm:$0xff]
      %v1035 = vld [vmem:[%s327 + $0x48] sm:$0xff]
      %v1036 = vpack.c.bf16 %v1029, %v1028
      %v1037 = vpack.c.bf16 %v1031, %v1030
      %v1038 = vpack.c.bf16 %v1033, %v1032
      %v1039 = vpack.c.bf16 %v1035, %v1034
      %v1040 = vld [vmem:[%s5] sm:$0xf]
      %v1041 = vld [vmem:[%s6] sm:$0x1]
      %v1043 = vperm.slane %v1041, 0
      %v1046 = vsel %vm427, %v1036, 0
      %v1049 = vsel %vm427, %v1037, 0
      %v1052 = vsel %vm427, %v1038, 0
      %v1055 = vsel %vm427, %v1039, 0
      %v1058 = vsel %vm440, %v1040, 0
      %1060 = vmatpush.bf16.msra.mxu0 0
      %1061 = vmatpush.bf16.msra.mxu0 0
      %1062 = vmatpush.bf16.msra.mxu0 0
      %1063 = vmatpush.bf16.msra.mxu0 0
      %1064 = vmatpush.bf16.msra.mxu0 0
      %1065 = vmatpush.bf16.msra.mxu0 0
      %1066 = vmatpush.bf16.msra.mxu0 0
      %1067 = vmatpush.bf16.msra.mxu0 %v1058
      %1068 = vmatmul.bf16.gmra.mxu0 %v1046
      %v1069 = vpop.f32.mrf.mxu0
      %v1070 = vadd.f32 %v1043, %v1069
      %v1071 = vpop.f32.mrf.mxu0
      %v1072 = vadd.f32 %v1043, %v1071
      %1073 = vmatmul.bf16.gmra.mxu0 %v1049
      %v1074 = vpop.f32.mrf.mxu0
      %v1075 = vadd.f32 %v1043, %v1074
      %v1076 = vpop.f32.mrf.mxu0
      %v1077 = vadd.f32 %v1043, %v1076
      %1078 = vmatmul.bf16.gmra.mxu0 %v1052
      %v1079 = vpop.f32.mrf.mxu0
      %v1080 = vadd.f32 %v1043, %v1079
      %v1081 = vpop.f32.mrf.mxu0
      %v1082 = vadd.f32 %v1043, %v1081
      %1083 = vmatmul.bf16.gmra.mxu0 %v1055
      %v1084 = vpop.f32.mrf.mxu0
      %v1085 = vadd.f32 %v1043, %v1084
      %v1086 = vpop.f32.mrf.mxu0
      %v1087 = vadd.f32 %v1043, %v1086
      %1088 = vdwg.mxu0
      %v1089 = vld [vmem:[%s4] sm:$0x1]
      %v1091 = vperm.slane %v1089, 0
      %v1093 = vadd.f32 %v1070, %v1091
      %v1094 = vadd.f32 %v1072, %v1091
      %v1095 = vadd.f32 %v1075, %v1091
      %v1096 = vadd.f32 %v1077, %v1091
      %v1097 = vadd.f32 %v1080, %v1091
      %v1098 = vadd.f32 %v1082, %v1091
      %v1099 = vadd.f32 %v1085, %v1091
      %v1100 = vadd.f32 %v1087, %v1091
      %v1101 = vld [vmem:[#allocation2 + $0x7] sm:$0xff]
      %v1102 = vld [vmem:[#allocation2 + $0xf] sm:$0xff]
      %v1103 = vld [vmem:[#allocation2 + $0x17] sm:$0xff]
      %v1104 = vld [vmem:[#allocation2 + $0x1f] sm:$0xff]
      %v1105 = vld [vmem:[#allocation2 + $0x27] sm:$0xff]
      %v1106 = vld [vmem:[#allocation2 + $0x2f] sm:$0xff]
      %v1107 = vld [vmem:[#allocation2 + $0x37] sm:$0xff]
      %v1108 = vld [vmem:[#allocation2 + $0x3f] sm:$0xff]
      %v1109 = vmul.f32 %v1101, %v362
      %v1110 = vmul.f32 %v1102, %v367
      %v1111 = vmul.f32 %v1103, %v372
      %v1112 = vmul.f32 %v1104, %v377
      %v1113 = vmul.f32 %v1105, %v382
      %v1114 = vmul.f32 %v1106, %v387
      %v1115 = vmul.f32 %v1107, %v392
      %v1116 = vmul.f32 %v1108, %v397
      %v1117 = vpack.c.bf16 %v1110, %v1109
      %v1118 = vpack.c.bf16 %v1112, %v1111
      %v1119 = vpack.c.bf16 %v1114, %v1113
      %v1120 = vpack.c.bf16 %v1116, %v1115
      %v1121 = vld [vmem:[%s3] sm:$0xf]
      %v1122 = vld [vmem:[%s3 + $0x4] sm:$0xf]
      %v1123 = vld [vmem:[%s3 + $0x8] sm:$0xf]
      %v1124 = vld [vmem:[%s3 + $0xc] sm:$0xf]
      %v1125 = vld [vmem:[%s3 + $0x10] sm:$0xf]
      %v1126 = vld [vmem:[%s3 + $0x14] sm:$0xf]
      %v1127 = vld [vmem:[%s3 + $0x18] sm:$0xf]
      %v1128 = vld [vmem:[%s3 + $0x1c] sm:$0xf]
      %v1129 = vld [vmem:[%s3 + $0x20] sm:$0xf]
      %v1130 = vld [vmem:[%s3 + $0x24] sm:$0xf]
      %v1131 = vld [vmem:[%s3 + $0x28] sm:$0xf]
      %v1132 = vld [vmem:[%s3 + $0x2c] sm:$0xf]
      %v1133 = vld [vmem:[%s3 + $0x30] sm:$0xf]
      %v1134 = vld [vmem:[%s3 + $0x34] sm:$0xf]
      %v1135 = vld [vmem:[%s3 + $0x38] sm:$0xf]
      %v1136 = vld [vmem:[%s3 + $0x3c] sm:$0xf]
      %v1153 = vunpack.c.l.b16 %v1121
      %v1154 = vunpack.c.l.b16 %v1122
      %v1155 = vunpack.c.l.b16 %v1123
      %v1156 = vunpack.c.l.b16 %v1124
      %v1157 = vunpack.c.l.b16 %v1125
      %v1158 = vunpack.c.l.b16 %v1126
      %v1159 = vunpack.c.l.b16 %v1127
      %v1160 = vunpack.c.l.b16 %v1128
      %v1161 = vunpack.c.l.b16 %v1129
      %v1162 = vunpack.c.l.b16 %v1130
      %v1163 = vunpack.c.l.b16 %v1131
      %v1164 = vunpack.c.l.b16 %v1132
      %v1165 = vunpack.c.l.b16 %v1133
      %v1166 = vunpack.c.l.b16 %v1134
      %v1167 = vunpack.c.l.b16 %v1135
      %v1168 = vunpack.c.l.b16 %v1136
      %v1169 = vpack.c.b16 %v1154, %v1153
      %v1170 = vpack.c.b16 %v1156, %v1155
      %v1171 = vpack.c.b16 %v1158, %v1157
      %v1172 = vpack.c.b16 %v1160, %v1159
      %v1173 = vpack.c.b16 %v1162, %v1161
      %v1174 = vpack.c.b16 %v1164, %v1163
      %v1175 = vpack.c.b16 %v1166, %v1165
      %v1176 = vpack.c.b16 %v1168, %v1167
      %1185 = vmatpush.bf16.msra.mxu0 %v1176
      %1186 = vmatpush.bf16.msra.mxu0 %v1175
      %1187 = vmatpush.bf16.msra.mxu0 %v1174
      %1188 = vmatpush.bf16.msra.mxu0 %v1173
      %1189 = vmatpush.bf16.msra.mxu0 %v1172
      %1190 = vmatpush.bf16.msra.mxu0 %v1171
      %1191 = vmatpush.bf16.msra.mxu0 %v1170
      %1192 = vmatpush.bf16.msra.mxu0 %v1169
      %1193 = vmatmul.bf16.gmra.mxu0 %v1117
      %v1194 = vpop.f32.mrf.mxu0
      %v1195 = vadd.f32 0.0, %v1194
      %v1196 = vpop.f32.mrf.mxu0
      %v1197 = vadd.f32 0.0, %v1196
      %1198 = vmatmul.bf16.gmra.mxu0 %v1118
      %v1199 = vpop.f32.mrf.mxu0
      %v1200 = vadd.f32 0.0, %v1199
      %v1201 = vpop.f32.mrf.mxu0
      %v1202 = vadd.f32 0.0, %v1201
      %1203 = vmatmul.bf16.gmra.mxu0 %v1119
      %v1204 = vpop.f32.mrf.mxu0
      %v1205 = vadd.f32 0.0, %v1204
      %v1206 = vpop.f32.mrf.mxu0
      %v1207 = vadd.f32 0.0, %v1206
      %1208 = vmatmul.bf16.gmra.mxu0 %v1120
      %v1209 = vpop.f32.mrf.mxu0
      %v1210 = vadd.f32 0.0, %v1209
      %v1211 = vpop.f32.mrf.mxu0
      %v1212 = vadd.f32 0.0, %v1211
      %1213 = vdwg.mxu0
      %v1214 = vadd.f32 %v1093, %v1195
      %v1215 = vadd.f32 %v1094, %v1197
      %v1216 = vadd.f32 %v1095, %v1200
      %v1217 = vadd.f32 %v1096, %v1202
      %v1218 = vadd.f32 %v1097, %v1205
      %v1219 = vadd.f32 %v1098, %v1207
      %v1220 = vadd.f32 %v1099, %v1210
      %v1221 = vadd.f32 %v1100, %v1212
      %v1222 = vld [vmem:[#allocation2 + $0x8] sm:$0xff]
      %v1223 = vld [vmem:[#allocation2 + $0x10] sm:$0xff]
      %v1224 = vld [vmem:[#allocation2 + $0x18] sm:$0xff]
      %v1225 = vld [vmem:[#allocation2 + $0x20] sm:$0xff]
      %v1226 = vld [vmem:[#allocation2 + $0x28] sm:$0xff]
      %v1227 = vld [vmem:[#allocation2 + $0x30] sm:$0xff]
      %v1228 = vld [vmem:[#allocation2 + $0x38] sm:$0xff]
      %v1229 = vld [vmem:[#allocation2 + $0x40] sm:$0xff]
      %v1230 = vpack.c.bf16 %v1223, %v1222
      %v1231 = vpack.c.bf16 %v1225, %v1224
      %v1232 = vpack.c.bf16 %v1227, %v1226
      %v1233 = vpack.c.bf16 %v1229, %v1228
      %s1234 = scalar_lea.vmem %s3, 64
      %v1235 = vld [vmem:[%s1234] sm:$0xf]
      %v1236 = vld [vmem:[%s1234 + $0x4] sm:$0xf]
      %v1237 = vld [vmem:[%s1234 + $0x8] sm:$0xf]
      %v1238 = vld [vmem:[%s1234 + $0xc] sm:$0xf]
      %v1239 = vld [vmem:[%s1234 + $0x10] sm:$0xf]
      %v1240 = vld [vmem:[%s1234 + $0x14] sm:$0xf]
      %v1241 = vld [vmem:[%s1234 + $0x18] sm:$0xf]
      %v1242 = vld [vmem:[%s1234 + $0x1c] sm:$0xf]
      %v1243 = vld [vmem:[%s1234 + $0x20] sm:$0xf]
      %v1244 = vld [vmem:[%s1234 + $0x24] sm:$0xf]
      %v1245 = vld [vmem:[%s1234 + $0x28] sm:$0xf]
      %v1246 = vld [vmem:[%s1234 + $0x2c] sm:$0xf]
      %v1247 = vld [vmem:[%s1234 + $0x30] sm:$0xf]
      %v1248 = vld [vmem:[%s1234 + $0x34] sm:$0xf]
      %v1249 = vld [vmem:[%s1234 + $0x38] sm:$0xf]
      %v1250 = vld [vmem:[%s1234 + $0x3c] sm:$0xf]
      %v1267 = vunpack.c.l.b16 %v1235
      %v1268 = vunpack.c.l.b16 %v1236
      %v1269 = vunpack.c.l.b16 %v1237
      %v1270 = vunpack.c.l.b16 %v1238
      %v1271 = vunpack.c.l.b16 %v1239
      %v1272 = vunpack.c.l.b16 %v1240
      %v1273 = vunpack.c.l.b16 %v1241
      %v1274 = vunpack.c.l.b16 %v1242
      %v1275 = vunpack.c.l.b16 %v1243
      %v1276 = vunpack.c.l.b16 %v1244
      %v1277 = vunpack.c.l.b16 %v1245
      %v1278 = vunpack.c.l.b16 %v1246
      %v1279 = vunpack.c.l.b16 %v1247
      %v1280 = vunpack.c.l.b16 %v1248
      %v1281 = vunpack.c.l.b16 %v1249
      %v1282 = vunpack.c.l.b16 %v1250
      %v1283 = vpack.c.b16 %v1268, %v1267
      %v1284 = vpack.c.b16 %v1270, %v1269
      %v1285 = vpack.c.b16 %v1272, %v1271
      %v1286 = vpack.c.b16 %v1274, %v1273
      %v1287 = vpack.c.b16 %v1276, %v1275
      %v1288 = vpack.c.b16 %v1278, %v1277
      %v1289 = vpack.c.b16 %v1280, %v1279
      %v1290 = vpack.c.b16 %v1282, %v1281
      %1299 = vmatpush.bf16.msra.mxu0 %v1290
      %1300 = vmatpush.bf16.msra.mxu0 %v1289
      %1301 = vmatpush.bf16.msra.mxu0 %v1288
      %1302 = vmatpush.bf16.msra.mxu0 %v1287
      %1303 = vmatpush.bf16.msra.mxu0 %v1286
      %1304 = vmatpush.bf16.msra.mxu0 %v1285
      %1305 = vmatpush.bf16.msra.mxu0 %v1284
      %1306 = vmatpush.bf16.msra.mxu0 %v1283
      %1307 = vmatmul.bf16.gmra.mxu0 %v1230
      %v1308 = vpop.f32.mrf.mxu0
      %v1309 = vadd.f32 0.0, %v1308
      %v1310 = vpop.f32.mrf.mxu0
      %v1311 = vadd.f32 0.0, %v1310
      %1312 = vmatmul.bf16.gmra.mxu0 %v1231
      %v1313 = vpop.f32.mrf.mxu0
      %v1314 = vadd.f32 0.0, %v1313
      %v1315 = vpop.f32.mrf.mxu0
      %v1316 = vadd.f32 0.0, %v1315
      %1317 = vmatmul.bf16.gmra.mxu0 %v1232
      %v1318 = vpop.f32.mrf.mxu0
      %v1319 = vadd.f32 0.0, %v1318
      %v1320 = vpop.f32.mrf.mxu0
      %v1321 = vadd.f32 0.0, %v1320
      %1322 = vmatmul.bf16.gmra.mxu0 %v1233
      %v1323 = vpop.f32.mrf.mxu0
      %v1324 = vadd.f32 0.0, %v1323
      %v1325 = vpop.f32.mrf.mxu0
      %v1326 = vadd.f32 0.0, %v1325
      %1327 = vdwg.mxu0
      %v1328 = vadd.f32 %v1214, %v1309
      %v1329 = vadd.f32 %v1215, %v1311
      %v1330 = vadd.f32 %v1216, %v1314
      %v1331 = vadd.f32 %v1217, %v1316
      %v1332 = vadd.f32 %v1218, %v1319
      %v1333 = vadd.f32 %v1219, %v1321
      %v1334 = vadd.f32 %v1220, %v1324
      %v1335 = vadd.f32 %v1221, %v1326
      %v1336 = vld [vmem:[#allocation2 + $0x9] sm:$0xff]
      %v1337 = vld [vmem:[#allocation2 + $0x11] sm:$0xff]
      %v1338 = vld [vmem:[#allocation2 + $0x19] sm:$0xff]
      %v1339 = vld [vmem:[#allocation2 + $0x21] sm:$0xff]
      %v1340 = vld [vmem:[#allocation2 + $0x29] sm:$0xff]
      %v1341 = vld [vmem:[#allocation2 + $0x31] sm:$0xff]
      %v1342 = vld [vmem:[#allocation2 + $0x39] sm:$0xff]
      %v1343 = vld [vmem:[#allocation2 + $0x41] sm:$0xff]
      %1345 = vset.pattern.permute.xlu0 0
      %1346 = vperm.xlu0 %1345, %v342
      %v1347 = vpop.permute.xlu0 %1346
      %1350 = vset.pattern.permute.xlu0 0
      %1351 = vperm.xlu0 %1350, %v343
      %v1352 = vpop.permute.xlu0 %1351
      %1355 = vset.pattern.permute.xlu0 0
      %1356 = vperm.xlu0 %1355, %v344
      %v1357 = vpop.permute.xlu0 %1356
      %1360 = vset.pattern.permute.xlu0 0
      %1361 = vperm.xlu0 %1360, %v345
      %v1362 = vpop.permute.xlu0 %1361
      %1365 = vset.pattern.permute.xlu0 0
      %1366 = vperm.xlu0 %1365, %v346
      %v1367 = vpop.permute.xlu0 %1366
      %1370 = vset.pattern.permute.xlu0 0
      %1371 = vperm.xlu0 %1370, %v347
      %v1372 = vpop.permute.xlu0 %1371
      %1375 = vset.pattern.permute.xlu0 0
      %1376 = vperm.xlu0 %1375, %v348
      %v1377 = vpop.permute.xlu0 %1376
      %1380 = vset.pattern.permute.xlu0 0
      %1381 = vperm.xlu0 %1380, %v349
      %v1382 = vpop.permute.xlu0 %1381
      %v1384 = vmul.f32 %v1336, %v1347
      %v1385 = vmul.f32 %v1337, %v1352
      %v1386 = vmul.f32 %v1338, %v1357
      %v1387 = vmul.f32 %v1339, %v1362
      %v1388 = vmul.f32 %v1340, %v1367
      %v1389 = vmul.f32 %v1341, %v1372
      %v1390 = vmul.f32 %v1342, %v1377
      %v1391 = vmul.f32 %v1343, %v1382
      %v1392 = vpack.c.bf16 %v1385, %v1384
      %v1393 = vpack.c.bf16 %v1387, %v1386
      %v1394 = vpack.c.bf16 %v1389, %v1388
      %v1395 = vpack.c.bf16 %v1391, %v1390
      %s1396 = scalar_lea.vmem %s3, 128
      %v1397 = vld [vmem:[%s1396] sm:$0xf]
      %v1398 = vld [vmem:[%s1396 + $0x4] sm:$0xf]
      %v1399 = vld [vmem:[%s1396 + $0x8] sm:$0xf]
      %v1400 = vld [vmem:[%s1396 + $0xc] sm:$0xf]
      %v1401 = vld [vmem:[%s1396 + $0x10] sm:$0xf]
      %v1402 = vld [vmem:[%s1396 + $0x14] sm:$0xf]
      %v1403 = vld [vmem:[%s1396 + $0x18] sm:$0xf]
      %v1404 = vld [vmem:[%s1396 + $0x1c] sm:$0xf]
      %v1405 = vld [vmem:[%s1396 + $0x20] sm:$0xf]
      %v1406 = vld [vmem:[%s1396 + $0x24] sm:$0xf]
      %v1407 = vld [vmem:[%s1396 + $0x28] sm:$0xf]
      %v1408 = vld [vmem:[%s1396 + $0x2c] sm:$0xf]
      %v1409 = vld [vmem:[%s1396 + $0x30] sm:$0xf]
      %v1410 = vld [vmem:[%s1396 + $0x34] sm:$0xf]
      %v1411 = vld [vmem:[%s1396 + $0x38] sm:$0xf]
      %v1412 = vld [vmem:[%s1396 + $0x3c] sm:$0xf]
      %v1429 = vunpack.c.l.b16 %v1397
      %v1430 = vunpack.c.l.b16 %v1398
      %v1431 = vunpack.c.l.b16 %v1399
      %v1432 = vunpack.c.l.b16 %v1400
      %v1433 = vunpack.c.l.b16 %v1401
      %v1434 = vunpack.c.l.b16 %v1402
      %v1435 = vunpack.c.l.b16 %v1403
      %v1436 = vunpack.c.l.b16 %v1404
      %v1437 = vunpack.c.l.b16 %v1405
      %v1438 = vunpack.c.l.b16 %v1406
      %v1439 = vunpack.c.l.b16 %v1407
      %v1440 = vunpack.c.l.b16 %v1408
      %v1441 = vunpack.c.l.b16 %v1409
      %v1442 = vunpack.c.l.b16 %v1410
      %v1443 = vunpack.c.l.b16 %v1411
      %v1444 = vunpack.c.l.b16 %v1412
      %v1445 = vpack.c.b16 %v1430, %v1429
      %v1446 = vpack.c.b16 %v1432, %v1431
      %v1447 = vpack.c.b16 %v1434, %v1433
      %v1448 = vpack.c.b16 %v1436, %v1435
      %v1449 = vpack.c.b16 %v1438, %v1437
      %v1450 = vpack.c.b16 %v1440, %v1439
      %v1451 = vpack.c.b16 %v1442, %v1441
      %v1452 = vpack.c.b16 %v1444, %v1443
      %1461 = vmatpush.bf16.msra.mxu0 %v1452
      %1462 = vmatpush.bf16.msra.mxu0 %v1451
      %1463 = vmatpush.bf16.msra.mxu0 %v1450
      %1464 = vmatpush.bf16.msra.mxu0 %v1449
      %1465 = vmatpush.bf16.msra.mxu0 %v1448
      %1466 = vmatpush.bf16.msra.mxu0 %v1447
      %1467 = vmatpush.bf16.msra.mxu0 %v1446
      %1468 = vmatpush.bf16.msra.mxu0 %v1445
      %1469 = vmatmul.bf16.gmra.mxu0 %v1392
      %v1470 = vpop.f32.mrf.mxu0
      %v1471 = vadd.f32 0.0, %v1470
      %v1472 = vpop.f32.mrf.mxu0
      %v1473 = vadd.f32 0.0, %v1472
      %1474 = vmatmul.bf16.gmra.mxu0 %v1393
      %v1475 = vpop.f32.mrf.mxu0
      %v1476 = vadd.f32 0.0, %v1475
      %v1477 = vpop.f32.mrf.mxu0
      %v1478 = vadd.f32 0.0, %v1477
      %1479 = vmatmul.bf16.gmra.mxu0 %v1394
      %v1480 = vpop.f32.mrf.mxu0
      %v1481 = vadd.f32 0.0, %v1480
      %v1482 = vpop.f32.mrf.mxu0
      %v1483 = vadd.f32 0.0, %v1482
      %1484 = vmatmul.bf16.gmra.mxu0 %v1395
      %v1485 = vpop.f32.mrf.mxu0
      %v1486 = vadd.f32 0.0, %v1485
      %v1487 = vpop.f32.mrf.mxu0
      %v1488 = vadd.f32 0.0, %v1487
      %1489 = vdwg.mxu0
      %v1490 = vadd.f32 %v1328, %v1471
      %v1491 = vadd.f32 %v1329, %v1473
      %v1492 = vadd.f32 %v1330, %v1476
      %v1493 = vadd.f32 %v1331, %v1478
      %v1494 = vadd.f32 %v1332, %v1481
      %v1495 = vadd.f32 %v1333, %v1483
      %v1496 = vadd.f32 %v1334, %v1486
      %v1497 = vadd.f32 %v1335, %v1488
      %v1498 = vld [vmem:[#allocation2 + $0xf] sm:$0xff]
      %v1499 = vld [vmem:[#allocation2 + $0x17] sm:$0xff]
      %v1500 = vld [vmem:[#allocation2 + $0x1f] sm:$0xff]
      %v1501 = vld [vmem:[#allocation2 + $0x27] sm:$0xff]
      %v1502 = vld [vmem:[#allocation2 + $0x2f] sm:$0xff]
      %v1503 = vld [vmem:[#allocation2 + $0x37] sm:$0xff]
      %v1504 = vld [vmem:[#allocation2 + $0x3f] sm:$0xff]
      %v1505 = vld [vmem:[#allocation2 + $0x47] sm:$0xff]
      %v1506 = vmul.f32 %v1498, %v362
      %v1507 = vmul.f32 %v1499, %v367
      %v1508 = vmul.f32 %v1500, %v372
      %v1509 = vmul.f32 %v1501, %v377
      %v1510 = vmul.f32 %v1502, %v382
      %v1511 = vmul.f32 %v1503, %v387
      %v1512 = vmul.f32 %v1504, %v392
      %v1513 = vmul.f32 %v1505, %v397
      %v1514 = vpack.c.bf16 %v1507, %v1506
      %v1515 = vpack.c.bf16 %v1509, %v1508
      %v1516 = vpack.c.bf16 %v1511, %v1510
      %v1517 = vpack.c.bf16 %v1513, %v1512
      %s1518 = scalar_lea.vmem %s3, 192
      %v1519 = vld [vmem:[%s1518] sm:$0xf]
      %v1520 = vld [vmem:[%s1518 + $0x4] sm:$0xf]
      %v1521 = vld [vmem:[%s1518 + $0x8] sm:$0xf]
      %v1522 = vld [vmem:[%s1518 + $0xc] sm:$0xf]
      %v1523 = vld [vmem:[%s1518 + $0x10] sm:$0xf]
      %v1524 = vld [vmem:[%s1518 + $0x14] sm:$0xf]
      %v1525 = vld [vmem:[%s1518 + $0x18] sm:$0xf]
      %v1526 = vld [vmem:[%s1518 + $0x1c] sm:$0xf]
      %v1527 = vld [vmem:[%s1518 + $0x20] sm:$0xf]
      %v1528 = vld [vmem:[%s1518 + $0x24] sm:$0xf]
      %v1529 = vld [vmem:[%s1518 + $0x28] sm:$0xf]
      %v1530 = vld [vmem:[%s1518 + $0x2c] sm:$0xf]
      %v1531 = vld [vmem:[%s1518 + $0x30] sm:$0xf]
      %v1532 = vld [vmem:[%s1518 + $0x34] sm:$0xf]
      %v1533 = vld [vmem:[%s1518 + $0x38] sm:$0xf]
      %v1534 = vld [vmem:[%s1518 + $0x3c] sm:$0xf]
      %v1551 = vunpack.c.l.b16 %v1519
      %v1552 = vunpack.c.l.b16 %v1520
      %v1553 = vunpack.c.l.b16 %v1521
      %v1554 = vunpack.c.l.b16 %v1522
      %v1555 = vunpack.c.l.b16 %v1523
      %v1556 = vunpack.c.l.b16 %v1524
      %v1557 = vunpack.c.l.b16 %v1525
      %v1558 = vunpack.c.l.b16 %v1526
      %v1559 = vunpack.c.l.b16 %v1527
      %v1560 = vunpack.c.l.b16 %v1528
      %v1561 = vunpack.c.l.b16 %v1529
      %v1562 = vunpack.c.l.b16 %v1530
      %v1563 = vunpack.c.l.b16 %v1531
      %v1564 = vunpack.c.l.b16 %v1532
      %v1565 = vunpack.c.l.b16 %v1533
      %v1566 = vunpack.c.l.b16 %v1534
      %v1567 = vpack.c.b16 %v1552, %v1551
      %v1568 = vpack.c.b16 %v1554, %v1553
      %v1569 = vpack.c.b16 %v1556, %v1555
      %v1570 = vpack.c.b16 %v1558, %v1557
      %v1571 = vpack.c.b16 %v1560, %v1559
      %v1572 = vpack.c.b16 %v1562, %v1561
      %v1573 = vpack.c.b16 %v1564, %v1563
      %v1574 = vpack.c.b16 %v1566, %v1565
      %1583 = vmatpush.bf16.msra.mxu0 %v1574
      %1584 = vmatpush.bf16.msra.mxu0 %v1573
      %1585 = vmatpush.bf16.msra.mxu0 %v1572
      %1586 = vmatpush.bf16.msra.mxu0 %v1571
      %1587 = vmatpush.bf16.msra.mxu0 %v1570
      %1588 = vmatpush.bf16.msra.mxu0 %v1569
      %1589 = vmatpush.bf16.msra.mxu0 %v1568
      %1590 = vmatpush.bf16.msra.mxu0 %v1567
      %1591 = vmatmul.bf16.gmra.mxu0 %v1514
      %v1592 = vpop.f32.mrf.mxu0
      %v1593 = vadd.f32 0.0, %v1592
      %v1594 = vpop.f32.mrf.mxu0
      %v1595 = vadd.f32 0.0, %v1594
      %1596 = vmatmul.bf16.gmra.mxu0 %v1515
      %v1597 = vpop.f32.mrf.mxu0
      %v1598 = vadd.f32 0.0, %v1597
      %v1599 = vpop.f32.mrf.mxu0
      %v1600 = vadd.f32 0.0, %v1599
      %1601 = vmatmul.bf16.gmra.mxu0 %v1516
      %v1602 = vpop.f32.mrf.mxu0
      %v1603 = vadd.f32 0.0, %v1602
      %v1604 = vpop.f32.mrf.mxu0
      %v1605 = vadd.f32 0.0, %v1604
      %1606 = vmatmul.bf16.gmra.mxu0 %v1517
      %v1607 = vpop.f32.mrf.mxu0
      %v1608 = vadd.f32 0.0, %v1607
      %v1609 = vpop.f32.mrf.mxu0
      %v1610 = vadd.f32 0.0, %v1609
      %1611 = vdwg.mxu0
      %v1612 = vadd.f32 %v1490, %v1593
      %v1613 = vadd.f32 %v1491, %v1595
      %v1614 = vadd.f32 %v1492, %v1598
      %v1615 = vadd.f32 %v1493, %v1600
      %v1616 = vadd.f32 %v1494, %v1603
      %v1617 = vadd.f32 %v1495, %v1605
      %v1618 = vadd.f32 %v1496, %v1608
      %v1619 = vadd.f32 %v1497, %v1610
      %v1620 = vld [vmem:[#allocation2 + $0x10] sm:$0xff]
      %v1621 = vld [vmem:[#allocation2 + $0x18] sm:$0xff]
      %v1622 = vld [vmem:[#allocation2 + $0x20] sm:$0xff]
      %v1623 = vld [vmem:[#allocation2 + $0x28] sm:$0xff]
      %v1624 = vld [vmem:[#allocation2 + $0x30] sm:$0xff]
      %v1625 = vld [vmem:[#allocation2 + $0x38] sm:$0xff]
      %v1626 = vld [vmem:[#allocation2 + $0x40] sm:$0xff]
      %v1627 = vld [vmem:[#allocation2 + $0x48] sm:$0xff]
      %v1628 = vpack.c.bf16 %v1621, %v1620
      %v1629 = vpack.c.bf16 %v1623, %v1622
      %v1630 = vpack.c.bf16 %v1625, %v1624
      %v1631 = vpack.c.bf16 %v1627, %v1626
      %s1632 = scalar_lea.vmem %s3, 256
      %v1633 = vld [vmem:[%s1632] sm:$0xf]
      %v1634 = vld [vmem:[%s1632 + $0x4] sm:$0xf]
      %v1635 = vld [vmem:[%s1632 + $0x8] sm:$0xf]
      %v1636 = vld [vmem:[%s1632 + $0xc] sm:$0xf]
      %v1637 = vld [vmem:[%s1632 + $0x10] sm:$0xf]
      %v1638 = vld [vmem:[%s1632 + $0x14] sm:$0xf]
      %v1639 = vld [vmem:[%s1632 + $0x18] sm:$0xf]
      %v1640 = vld [vmem:[%s1632 + $0x1c] sm:$0xf]
      %v1641 = vld [vmem:[%s1632 + $0x20] sm:$0xf]
      %v1642 = vld [vmem:[%s1632 + $0x24] sm:$0xf]
      %v1643 = vld [vmem:[%s1632 + $0x28] sm:$0xf]
      %v1644 = vld [vmem:[%s1632 + $0x2c] sm:$0xf]
      %v1645 = vld [vmem:[%s1632 + $0x30] sm:$0xf]
      %v1646 = vld [vmem:[%s1632 + $0x34] sm:$0xf]
      %v1647 = vld [vmem:[%s1632 + $0x38] sm:$0xf]
      %v1648 = vld [vmem:[%s1632 + $0x3c] sm:$0xf]
      %v1665 = vunpack.c.l.b16 %v1633
      %v1666 = vunpack.c.l.b16 %v1634
      %v1667 = vunpack.c.l.b16 %v1635
      %v1668 = vunpack.c.l.b16 %v1636
      %v1669 = vunpack.c.l.b16 %v1637
      %v1670 = vunpack.c.l.b16 %v1638
      %v1671 = vunpack.c.l.b16 %v1639
      %v1672 = vunpack.c.l.b16 %v1640
      %v1673 = vunpack.c.l.b16 %v1641
      %v1674 = vunpack.c.l.b16 %v1642
      %v1675 = vunpack.c.l.b16 %v1643
      %v1676 = vunpack.c.l.b16 %v1644
      %v1677 = vunpack.c.l.b16 %v1645
      %v1678 = vunpack.c.l.b16 %v1646
      %v1679 = vunpack.c.l.b16 %v1647
      %v1680 = vunpack.c.l.b16 %v1648
      %v1681 = vpack.c.b16 %v1666, %v1665
      %v1682 = vpack.c.b16 %v1668, %v1667
      %v1683 = vpack.c.b16 %v1670, %v1669
      %v1684 = vpack.c.b16 %v1672, %v1671
      %v1685 = vpack.c.b16 %v1674, %v1673
      %v1686 = vpack.c.b16 %v1676, %v1675
      %v1687 = vpack.c.b16 %v1678, %v1677
      %v1688 = vpack.c.b16 %v1680, %v1679
      %1697 = vmatpush.bf16.msra.mxu0 %v1688
      %1698 = vmatpush.bf16.msra.mxu0 %v1687
      %1699 = vmatpush.bf16.msra.mxu0 %v1686
      %1700 = vmatpush.bf16.msra.mxu0 %v1685
      %1701 = vmatpush.bf16.msra.mxu0 %v1684
      %1702 = vmatpush.bf16.msra.mxu0 %v1683
      %1703 = vmatpush.bf16.msra.mxu0 %v1682
      %1704 = vmatpush.bf16.msra.mxu0 %v1681
      %1705 = vmatmul.bf16.gmra.mxu0 %v1628
      %v1706 = vpop.f32.mrf.mxu0
      %v1707 = vadd.f32 0.0, %v1706
      %v1708 = vpop.f32.mrf.mxu0
      %v1709 = vadd.f32 0.0, %v1708
      %1710 = vmatmul.bf16.gmra.mxu0 %v1629
      %v1711 = vpop.f32.mrf.mxu0
      %v1712 = vadd.f32 0.0, %v1711
      %v1713 = vpop.f32.mrf.mxu0
      %v1714 = vadd.f32 0.0, %v1713
      %1715 = vmatmul.bf16.gmra.mxu0 %v1630
      %v1716 = vpop.f32.mrf.mxu0
      %v1717 = vadd.f32 0.0, %v1716
      %v1718 = vpop.f32.mrf.mxu0
      %v1719 = vadd.f32 0.0, %v1718
      %1720 = vmatmul.bf16.gmra.mxu0 %v1631
      %v1721 = vpop.f32.mrf.mxu0
      %v1722 = vadd.f32 0.0, %v1721
      %v1723 = vpop.f32.mrf.mxu0
      %v1724 = vadd.f32 0.0, %v1723
      %1725 = vdwg.mxu0
      %v1726 = vadd.f32 %v1612, %v1707
      %v1727 = vadd.f32 %v1613, %v1709
      %v1728 = vadd.f32 %v1614, %v1712
      %v1729 = vadd.f32 %v1615, %v1714
      %v1730 = vadd.f32 %v1616, %v1717
      %v1731 = vadd.f32 %v1617, %v1719
      %v1732 = vadd.f32 %v1618, %v1722
      %v1733 = vadd.f32 %v1619, %v1724
      %v1734 = vld [vmem:[#allocation2 + $0x11] sm:$0xff]
      %v1735 = vld [vmem:[#allocation2 + $0x19] sm:$0xff]
      %v1736 = vld [vmem:[#allocation2 + $0x21] sm:$0xff]
      %v1737 = vld [vmem:[#allocation2 + $0x29] sm:$0xff]
      %v1738 = vld [vmem:[#allocation2 + $0x31] sm:$0xff]
      %v1739 = vld [vmem:[#allocation2 + $0x39] sm:$0xff]
      %v1740 = vld [vmem:[#allocation2 + $0x41] sm:$0xff]
      %v1741 = vld [vmem:[#allocation2 + $0x49] sm:$0xff]
      %v1742 = vmul.f32 %v1734, %v1347
      %v1743 = vmul.f32 %v1735, %v1352
      %v1744 = vmul.f32 %v1736, %v1357
      %v1745 = vmul.f32 %v1737, %v1362
      %v1746 = vmul.f32 %v1738, %v1367
      %v1747 = vmul.f32 %v1739, %v1372
      %v1748 = vmul.f32 %v1740, %v1377
      %v1749 = vmul.f32 %v1741, %v1382
      %v1750 = vpack.c.bf16 %v1743, %v1742
      %v1751 = vpack.c.bf16 %v1745, %v1744
      %v1752 = vpack.c.bf16 %v1747, %v1746
      %v1753 = vpack.c.bf16 %v1749, %v1748
      %s1754 = scalar_lea.vmem %s3, 320
      %v1755 = vld [vmem:[%s1754] sm:$0xf]
      %v1756 = vld [vmem:[%s1754 + $0x4] sm:$0xf]
      %v1757 = vld [vmem:[%s1754 + $0x8] sm:$0xf]
      %v1758 = vld [vmem:[%s1754 + $0xc] sm:$0xf]
      %v1759 = vld [vmem:[%s1754 + $0x10] sm:$0xf]
      %v1760 = vld [vmem:[%s1754 + $0x14] sm:$0xf]
      %v1761 = vld [vmem:[%s1754 + $0x18] sm:$0xf]
      %v1762 = vld [vmem:[%s1754 + $0x1c] sm:$0xf]
      %v1763 = vld [vmem:[%s1754 + $0x20] sm:$0xf]
      %v1764 = vld [vmem:[%s1754 + $0x24] sm:$0xf]
      %v1765 = vld [vmem:[%s1754 + $0x28] sm:$0xf]
      %v1766 = vld [vmem:[%s1754 + $0x2c] sm:$0xf]
      %v1767 = vld [vmem:[%s1754 + $0x30] sm:$0xf]
      %v1768 = vld [vmem:[%s1754 + $0x34] sm:$0xf]
      %v1769 = vld [vmem:[%s1754 + $0x38] sm:$0xf]
      %v1770 = vld [vmem:[%s1754 + $0x3c] sm:$0xf]
      %v1787 = vunpack.c.l.b16 %v1755
      %v1788 = vunpack.c.l.b16 %v1756
      %v1789 = vunpack.c.l.b16 %v1757
      %v1790 = vunpack.c.l.b16 %v1758
      %v1791 = vunpack.c.l.b16 %v1759
      %v1792 = vunpack.c.l.b16 %v1760
      %v1793 = vunpack.c.l.b16 %v1761
      %v1794 = vunpack.c.l.b16 %v1762
      %v1795 = vunpack.c.l.b16 %v1763
      %v1796 = vunpack.c.l.b16 %v1764
      %v1797 = vunpack.c.l.b16 %v1765
      %v1798 = vunpack.c.l.b16 %v1766
      %v1799 = vunpack.c.l.b16 %v1767
      %v1800 = vunpack.c.l.b16 %v1768
      %v1801 = vunpack.c.l.b16 %v1769
      %v1802 = vunpack.c.l.b16 %v1770
      %v1803 = vpack.c.b16 %v1788, %v1787
      %v1804 = vpack.c.b16 %v1790, %v1789
      %v1805 = vpack.c.b16 %v1792, %v1791
      %v1806 = vpack.c.b16 %v1794, %v1793
      %v1807 = vpack.c.b16 %v1796, %v1795
      %v1808 = vpack.c.b16 %v1798, %v1797
      %v1809 = vpack.c.b16 %v1800, %v1799
      %v1810 = vpack.c.b16 %v1802, %v1801
      %1819 = vmatpush.bf16.msra.mxu0 %v1810
      %1820 = vmatpush.bf16.msra.mxu0 %v1809
      %1821 = vmatpush.bf16.msra.mxu0 %v1808
      %1822 = vmatpush.bf16.msra.mxu0 %v1807
      %1823 = vmatpush.bf16.msra.mxu0 %v1806
      %1824 = vmatpush.bf16.msra.mxu0 %v1805
      %1825 = vmatpush.bf16.msra.mxu0 %v1804
      %1826 = vmatpush.bf16.msra.mxu0 %v1803
      %1827 = vmatmul.bf16.gmra.mxu0 %v1750
      %v1828 = vpop.f32.mrf.mxu0
      %v1829 = vadd.f32 0.0, %v1828
      %v1830 = vpop.f32.mrf.mxu0
      %v1831 = vadd.f32 0.0, %v1830
      %1832 = vmatmul.bf16.gmra.mxu0 %v1751
      %v1833 = vpop.f32.mrf.mxu0
      %v1834 = vadd.f32 0.0, %v1833
      %v1835 = vpop.f32.mrf.mxu0
      %v1836 = vadd.f32 0.0, %v1835
      %1837 = vmatmul.bf16.gmra.mxu0 %v1752
      %v1838 = vpop.f32.mrf.mxu0
      %v1839 = vadd.f32 0.0, %v1838
      %v1840 = vpop.f32.mrf.mxu0
      %v1841 = vadd.f32 0.0, %v1840
      %1842 = vmatmul.bf16.gmra.mxu0 %v1753
      %v1843 = vpop.f32.mrf.mxu0
      %v1844 = vadd.f32 0.0, %v1843
      %v1845 = vpop.f32.mrf.mxu0
      %v1846 = vadd.f32 0.0, %v1845
      %1847 = vdwg.mxu0
      %v1848 = vadd.f32 %v1726, %v1829
      %v1849 = vadd.f32 %v1727, %v1831
      %v1850 = vadd.f32 %v1728, %v1834
      %v1851 = vadd.f32 %v1729, %v1836
      %v1852 = vadd.f32 %v1730, %v1839
      %v1853 = vadd.f32 %v1731, %v1841
      %v1854 = vadd.f32 %v1732, %v1844
      %v1855 = vadd.f32 %v1733, %v1846
      %v1856 = vld [vmem:[#allocation2 + $0x17] sm:$0xff]
      %v1857 = vld [vmem:[#allocation2 + $0x1f] sm:$0xff]
      %v1858 = vld [vmem:[#allocation2 + $0x27] sm:$0xff]
      %v1859 = vld [vmem:[#allocation2 + $0x2f] sm:$0xff]
      %v1860 = vld [vmem:[#allocation2 + $0x37] sm:$0xff]
      %v1861 = vld [vmem:[#allocation2 + $0x3f] sm:$0xff]
      %v1862 = vld [vmem:[#allocation2 + $0x47] sm:$0xff]
      %v1863 = vld [vmem:[#allocation2 + $0x4f] sm:$0xff]
      %v1864 = vmul.f32 %v1856, %v362
      %v1865 = vmul.f32 %v1857, %v367
      %v1866 = vmul.f32 %v1858, %v372
      %v1867 = vmul.f32 %v1859, %v377
      %v1868 = vmul.f32 %v1860, %v382
      %v1869 = vmul.f32 %v1861, %v387
      %v1870 = vmul.f32 %v1862, %v392
      %v1871 = vmul.f32 %v1863, %v397
      %v1872 = vpack.c.bf16 %v1865, %v1864
      %v1873 = vpack.c.bf16 %v1867, %v1866
      %v1874 = vpack.c.bf16 %v1869, %v1868
      %v1875 = vpack.c.bf16 %v1871, %v1870
      %s1876 = scalar_lea.vmem %s3, 384
      %v1877 = vld [vmem:[%s1876] sm:$0xf]
      %v1878 = vld [vmem:[%s1876 + $0x4] sm:$0xf]
      %v1879 = vld [vmem:[%s1876 + $0x8] sm:$0xf]
      %v1880 = vld [vmem:[%s1876 + $0xc] sm:$0xf]
      %v1881 = vld [vmem:[%s1876 + $0x10] sm:$0xf]
      %v1882 = vld [vmem:[%s1876 + $0x14] sm:$0xf]
      %v1883 = vld [vmem:[%s1876 + $0x18] sm:$0xf]
      %v1884 = vld [vmem:[%s1876 + $0x1c] sm:$0xf]
      %v1885 = vld [vmem:[%s1876 + $0x20] sm:$0xf]
      %v1886 = vld [vmem:[%s1876 + $0x24] sm:$0xf]
      %v1887 = vld [vmem:[%s1876 + $0x28] sm:$0xf]
      %v1888 = vld [vmem:[%s1876 + $0x2c] sm:$0xf]
      %v1889 = vld [vmem:[%s1876 + $0x30] sm:$0xf]
      %v1890 = vld [vmem:[%s1876 + $0x34] sm:$0xf]
      %v1891 = vld [vmem:[%s1876 + $0x38] sm:$0xf]
      %v1892 = vld [vmem:[%s1876 + $0x3c] sm:$0xf]
      %v1909 = vunpack.c.l.b16 %v1877
      %v1910 = vunpack.c.l.b16 %v1878
      %v1911 = vunpack.c.l.b16 %v1879
      %v1912 = vunpack.c.l.b16 %v1880
      %v1913 = vunpack.c.l.b16 %v1881
      %v1914 = vunpack.c.l.b16 %v1882
      %v1915 = vunpack.c.l.b16 %v1883
      %v1916 = vunpack.c.l.b16 %v1884
      %v1917 = vunpack.c.l.b16 %v1885
      %v1918 = vunpack.c.l.b16 %v1886
      %v1919 = vunpack.c.l.b16 %v1887
      %v1920 = vunpack.c.l.b16 %v1888
      %v1921 = vunpack.c.l.b16 %v1889
      %v1922 = vunpack.c.l.b16 %v1890
      %v1923 = vunpack.c.l.b16 %v1891
      %v1924 = vunpack.c.l.b16 %v1892
      %v1925 = vpack.c.b16 %v1910, %v1909
      %v1926 = vpack.c.b16 %v1912, %v1911
      %v1927 = vpack.c.b16 %v1914, %v1913
      %v1928 = vpack.c.b16 %v1916, %v1915
      %v1929 = vpack.c.b16 %v1918, %v1917
      %v1930 = vpack.c.b16 %v1920, %v1919
      %v1931 = vpack.c.b16 %v1922, %v1921
      %v1932 = vpack.c.b16 %v1924, %v1923
      %1941 = vmatpush.bf16.msra.mxu0 %v1932
      %1942 = vmatpush.bf16.msra.mxu0 %v1931
      %1943 = vmatpush.bf16.msra.mxu0 %v1930
      %1944 = vmatpush.bf16.msra.mxu0 %v1929
      %1945 = vmatpush.bf16.msra.mxu0 %v1928
      %1946 = vmatpush.bf16.msra.mxu0 %v1927
      %1947 = vmatpush.bf16.msra.mxu0 %v1926
      %1948 = vmatpush.bf16.msra.mxu0 %v1925
      %1949 = vmatmul.bf16.gmra.mxu0 %v1872
      %v1950 = vpop.f32.mrf.mxu0
      %v1951 = vadd.f32 0.0, %v1950
      %v1952 = vpop.f32.mrf.mxu0
      %v1953 = vadd.f32 0.0, %v1952
      %1954 = vmatmul.bf16.gmra.mxu0 %v1873
      %v1955 = vpop.f32.mrf.mxu0
      %v1956 = vadd.f32 0.0, %v1955
      %v1957 = vpop.f32.mrf.mxu0
      %v1958 = vadd.f32 0.0, %v1957
      %1959 = vmatmul.bf16.gmra.mxu0 %v1874
      %v1960 = vpop.f32.mrf.mxu0
      %v1961 = vadd.f32 0.0, %v1960
      %v1962 = vpop.f32.mrf.mxu0
      %v1963 = vadd.f32 0.0, %v1962
      %1964 = vmatmul.bf16.gmra.mxu0 %v1875
      %v1965 = vpop.f32.mrf.mxu0
      %v1966 = vadd.f32 0.0, %v1965
      %v1967 = vpop.f32.mrf.mxu0
      %v1968 = vadd.f32 0.0, %v1967
      %1969 = vdwg.mxu0
      %v1970 = vadd.f32 %v1848, %v1951
      %v1971 = vadd.f32 %v1849, %v1953
      %v1972 = vadd.f32 %v1850, %v1956
      %v1973 = vadd.f32 %v1851, %v1958
      %v1974 = vadd.f32 %v1852, %v1961
      %v1975 = vadd.f32 %v1853, %v1963
      %v1976 = vadd.f32 %v1854, %v1966
      %v1977 = vadd.f32 %v1855, %v1968
      %v1978 = vld [vmem:[#allocation2 + $0x18] sm:$0xff]
      %v1979 = vld [vmem:[#allocation2 + $0x20] sm:$0xff]
      %v1980 = vld [vmem:[#allocation2 + $0x28] sm:$0xff]
      %v1981 = vld [vmem:[#allocation2 + $0x30] sm:$0xff]
      %v1982 = vld [vmem:[#allocation2 + $0x38] sm:$0xff]
      %v1983 = vld [vmem:[#allocation2 + $0x40] sm:$0xff]
      %v1984 = vld [vmem:[#allocation2 + $0x48] sm:$0xff]
      %v1985 = vld [vmem:[#allocation2 + $0x50] sm:$0xff]
      %v1986 = vpack.c.bf16 %v1979, %v1978
      %v1987 = vpack.c.bf16 %v1981, %v1980
      %v1988 = vpack.c.bf16 %v1983, %v1982
      %v1989 = vpack.c.bf16 %v1985, %v1984
      %s1990 = scalar_lea.vmem %s3, 448
      %v1991 = vld [vmem:[%s1990] sm:$0xf]
      %v1992 = vld [vmem:[%s1990 + $0x4] sm:$0xf]
      %v1993 = vld [vmem:[%s1990 + $0x8] sm:$0xf]
      %v1994 = vld [vmem:[%s1990 + $0xc] sm:$0xf]
      %v1995 = vld [vmem:[%s1990 + $0x10] sm:$0xf]
      %v1996 = vld [vmem:[%s1990 + $0x14] sm:$0xf]
      %v1997 = vld [vmem:[%s1990 + $0x18] sm:$0xf]
      %v1998 = vld [vmem:[%s1990 + $0x1c] sm:$0xf]
      %v1999 = vld [vmem:[%s1990 + $0x20] sm:$0xf]
      %v2000 = vld [vmem:[%s1990 + $0x24] sm:$0xf]
      %v2001 = vld [vmem:[%s1990 + $0x28] sm:$0xf]
      %v2002 = vld [vmem:[%s1990 + $0x2c] sm:$0xf]
      %v2003 = vld [vmem:[%s1990 + $0x30] sm:$0xf]
      %v2004 = vld [vmem:[%s1990 + $0x34] sm:$0xf]
      %v2005 = vld [vmem:[%s1990 + $0x38] sm:$0xf]
      %v2006 = vld [vmem:[%s1990 + $0x3c] sm:$0xf]
      %v2023 = vunpack.c.l.b16 %v1991
      %v2024 = vunpack.c.l.b16 %v1992
      %v2025 = vunpack.c.l.b16 %v1993
      %v2026 = vunpack.c.l.b16 %v1994
      %v2027 = vunpack.c.l.b16 %v1995
      %v2028 = vunpack.c.l.b16 %v1996
      %v2029 = vunpack.c.l.b16 %v1997
      %v2030 = vunpack.c.l.b16 %v1998
      %v2031 = vunpack.c.l.b16 %v1999
      %v2032 = vunpack.c.l.b16 %v2000
      %v2033 = vunpack.c.l.b16 %v2001
      %v2034 = vunpack.c.l.b16 %v2002
      %v2035 = vunpack.c.l.b16 %v2003
      %v2036 = vunpack.c.l.b16 %v2004
      %v2037 = vunpack.c.l.b16 %v2005
      %v2038 = vunpack.c.l.b16 %v2006
      %v2039 = vpack.c.b16 %v2024, %v2023
      %v2040 = vpack.c.b16 %v2026, %v2025
      %v2041 = vpack.c.b16 %v2028, %v2027
      %v2042 = vpack.c.b16 %v2030, %v2029
      %v2043 = vpack.c.b16 %v2032, %v2031
      %v2044 = vpack.c.b16 %v2034, %v2033
      %v2045 = vpack.c.b16 %v2036, %v2035
      %v2046 = vpack.c.b16 %v2038, %v2037
      %2055 = vmatpush.bf16.msra.mxu0 %v2046
      %2056 = vmatpush.bf16.msra.mxu0 %v2045
      %2057 = vmatpush.bf16.msra.mxu0 %v2044
      %2058 = vmatpush.bf16.msra.mxu0 %v2043
      %2059 = vmatpush.bf16.msra.mxu0 %v2042
      %2060 = vmatpush.bf16.msra.mxu0 %v2041
      %2061 = vmatpush.bf16.msra.mxu0 %v2040
      %2062 = vmatpush.bf16.msra.mxu0 %v2039
      %2063 = vmatmul.bf16.gmra.mxu0 %v1986
      %v2064 = vpop.f32.mrf.mxu0
      %v2065 = vadd.f32 0.0, %v2064
      %v2066 = vpop.f32.mrf.mxu0
      %v2067 = vadd.f32 0.0, %v2066
      %2068 = vmatmul.bf16.gmra.mxu0 %v1987
      %v2069 = vpop.f32.mrf.mxu0
      %v2070 = vadd.f32 0.0, %v2069
      %v2071 = vpop.f32.mrf.mxu0
      %v2072 = vadd.f32 0.0, %v2071
      %2073 = vmatmul.bf16.gmra.mxu0 %v1988
      %v2074 = vpop.f32.mrf.mxu0
      %v2075 = vadd.f32 0.0, %v2074
      %v2076 = vpop.f32.mrf.mxu0
      %v2077 = vadd.f32 0.0, %v2076
      %2078 = vmatmul.bf16.gmra.mxu0 %v1989
      %v2079 = vpop.f32.mrf.mxu0
      %v2080 = vadd.f32 0.0, %v2079
      %v2081 = vpop.f32.mrf.mxu0
      %v2082 = vadd.f32 0.0, %v2081
      %2083 = vdwg.mxu0
      %v2084 = vadd.f32 %v1970, %v2065
      %v2085 = vadd.f32 %v1971, %v2067
      %v2086 = vadd.f32 %v1972, %v2070
      %v2087 = vadd.f32 %v1973, %v2072
      %v2088 = vadd.f32 %v1974, %v2075
      %v2089 = vadd.f32 %v1975, %v2077
      %v2090 = vadd.f32 %v1976, %v2080
      %v2091 = vadd.f32 %v1977, %v2082
      %v2092 = vld [vmem:[#allocation2 + $0x19] sm:$0xff]
      %v2093 = vld [vmem:[#allocation2 + $0x21] sm:$0xff]
      %v2094 = vld [vmem:[#allocation2 + $0x29] sm:$0xff]
      %v2095 = vld [vmem:[#allocation2 + $0x31] sm:$0xff]
      %v2096 = vld [vmem:[#allocation2 + $0x39] sm:$0xff]
      %v2097 = vld [vmem:[#allocation2 + $0x41] sm:$0xff]
      %v2098 = vld [vmem:[#allocation2 + $0x49] sm:$0xff]
      %v2099 = vld [vmem:[#allocation2 + $0x51] sm:$0xff]
      %v2100 = vmul.f32 %v2092, %v1347
      %v2101 = vmul.f32 %v2093, %v1352
      %v2102 = vmul.f32 %v2094, %v1357
      %v2103 = vmul.f32 %v2095, %v1362
      %v2104 = vmul.f32 %v2096, %v1367
      %v2105 = vmul.f32 %v2097, %v1372
      %v2106 = vmul.f32 %v2098, %v1377
      %v2107 = vmul.f32 %v2099, %v1382
      %v2108 = vpack.c.bf16 %v2101, %v2100
      %v2109 = vpack.c.bf16 %v2103, %v2102
      %v2110 = vpack.c.bf16 %v2105, %v2104
      %v2111 = vpack.c.bf16 %v2107, %v2106
      %s2112 = scalar_lea.vmem %s3, 512
      %v2113 = vld [vmem:[%s2112] sm:$0xf]
      %v2114 = vld [vmem:[%s2112 + $0x4] sm:$0xf]
      %v2115 = vld [vmem:[%s2112 + $0x8] sm:$0xf]
      %v2116 = vld [vmem:[%s2112 + $0xc] sm:$0xf]
      %v2117 = vld [vmem:[%s2112 + $0x10] sm:$0xf]
      %v2118 = vld [vmem:[%s2112 + $0x14] sm:$0xf]
      %v2119 = vld [vmem:[%s2112 + $0x18] sm:$0xf]
      %v2120 = vld [vmem:[%s2112 + $0x1c] sm:$0xf]
      %v2121 = vld [vmem:[%s2112 + $0x20] sm:$0xf]
      %v2122 = vld [vmem:[%s2112 + $0x24] sm:$0xf]
      %v2123 = vld [vmem:[%s2112 + $0x28] sm:$0xf]
      %v2124 = vld [vmem:[%s2112 + $0x2c] sm:$0xf]
      %v2125 = vld [vmem:[%s2112 + $0x30] sm:$0xf]
      %v2126 = vld [vmem:[%s2112 + $0x34] sm:$0xf]
      %v2127 = vld [vmem:[%s2112 + $0x38] sm:$0xf]
      %v2128 = vld [vmem:[%s2112 + $0x3c] sm:$0xf]
      %v2145 = vunpack.c.l.b16 %v2113
      %v2146 = vunpack.c.l.b16 %v2114
      %v2147 = vunpack.c.l.b16 %v2115
      %v2148 = vunpack.c.l.b16 %v2116
      %v2149 = vunpack.c.l.b16 %v2117
      %v2150 = vunpack.c.l.b16 %v2118
      %v2151 = vunpack.c.l.b16 %v2119
      %v2152 = vunpack.c.l.b16 %v2120
      %v2153 = vunpack.c.l.b16 %v2121
      %v2154 = vunpack.c.l.b16 %v2122
      %v2155 = vunpack.c.l.b16 %v2123
      %v2156 = vunpack.c.l.b16 %v2124
      %v2157 = vunpack.c.l.b16 %v2125
      %v2158 = vunpack.c.l.b16 %v2126
      %v2159 = vunpack.c.l.b16 %v2127
      %v2160 = vunpack.c.l.b16 %v2128
      %v2161 = vpack.c.b16 %v2146, %v2145
      %v2162 = vpack.c.b16 %v2148, %v2147
      %v2163 = vpack.c.b16 %v2150, %v2149
      %v2164 = vpack.c.b16 %v2152, %v2151
      %v2165 = vpack.c.b16 %v2154, %v2153
      %v2166 = vpack.c.b16 %v2156, %v2155
      %v2167 = vpack.c.b16 %v2158, %v2157
      %v2168 = vpack.c.b16 %v2160, %v2159
      %2177 = vmatpush.bf16.msra.mxu0 %v2168
      %2178 = vmatpush.bf16.msra.mxu0 %v2167
      %2179 = vmatpush.bf16.msra.mxu0 %v2166
      %2180 = vmatpush.bf16.msra.mxu0 %v2165
      %2181 = vmatpush.bf16.msra.mxu0 %v2164
      %2182 = vmatpush.bf16.msra.mxu0 %v2163
      %2183 = vmatpush.bf16.msra.mxu0 %v2162
      %2184 = vmatpush.bf16.msra.mxu0 %v2161
      %2185 = vmatmul.bf16.gmra.mxu0 %v2108
      %v2186 = vpop.f32.mrf.mxu0
      %v2187 = vadd.f32 0.0, %v2186
      %v2188 = vpop.f32.mrf.mxu0
      %v2189 = vadd.f32 0.0, %v2188
      %2190 = vmatmul.bf16.gmra.mxu0 %v2109
      %v2191 = vpop.f32.mrf.mxu0
      %v2192 = vadd.f32 0.0, %v2191
      %v2193 = vpop.f32.mrf.mxu0
      %v2194 = vadd.f32 0.0, %v2193
      %2195 = vmatmul.bf16.gmra.mxu0 %v2110
      %v2196 = vpop.f32.mrf.mxu0
      %v2197 = vadd.f32 0.0, %v2196
      %v2198 = vpop.f32.mrf.mxu0
      %v2199 = vadd.f32 0.0, %v2198
      %2200 = vmatmul.bf16.gmra.mxu0 %v2111
      %v2201 = vpop.f32.mrf.mxu0
      %v2202 = vadd.f32 0.0, %v2201
      %v2203 = vpop.f32.mrf.mxu0
      %v2204 = vadd.f32 0.0, %v2203
      %2205 = vdwg.mxu0
      %v2206 = vadd.f32 %v2084, %v2187
      %v2207 = vadd.f32 %v2085, %v2189
      %v2208 = vadd.f32 %v2086, %v2192
      %v2209 = vadd.f32 %v2087, %v2194
      %v2210 = vadd.f32 %v2088, %v2197
      %v2211 = vadd.f32 %v2089, %v2199
      %v2212 = vadd.f32 %v2090, %v2202
      %v2213 = vadd.f32 %v2091, %v2204
      %v2214 = vmax.f32 %v2206, 0.0
      %v2215 = vmax.f32 %v2207, 0.0
      %v2216 = vmax.f32 %v2208, 0.0
      %v2217 = vmax.f32 %v2209, 0.0
      %v2218 = vmax.f32 %v2210, 0.0
      %v2219 = vmax.f32 %v2211, 0.0
      %v2220 = vmax.f32 %v2212, 0.0
      %v2221 = vmax.f32 %v2213, 0.0
      %2222 = vst [vmem:[%s332] sm:$0xff] %v2214
      %2223 = vst [vmem:[%s332 + $0x8] sm:$0xff] %v2215
      %2224 = vst [vmem:[%s332 + $0x10] sm:$0xff] %v2216
      %2225 = vst [vmem:[%s332 + $0x18] sm:$0xff] %v2217
      %2226 = vst [vmem:[%s332 + $0x20] sm:$0xff] %v2218
      %2227 = vst [vmem:[%s332 + $0x28] sm:$0xff] %v2219
      %2228 = vst [vmem:[%s332 + $0x30] sm:$0xff] %v2220
      %2229 = vst [vmem:[%s332 + $0x38] sm:$0xff] %v2221
      %p2230 = scmp.lt.s32.totalorder %s20, 1
      %s2231 = scalar_select %p2230, %s20, 1
      %s2232 = smul.addr %s2231, 8
      %s2233 = smul.addr %s2232, 8
      %s2234 = scalar_lea.vmem %s9, %s2233
      // Predicated region
      $region57: #{basic_block_forward.1} parent=55 // pred_check
        %p2235 = pneg %p232
      $region58: #{basic_block_forward.1} parent=55 // pred_check_branch
        %2237 = sbr.rel (%p2235) target = $region60
      $region59: #{basic_block_forward.1} parent=55 // pred_region
        _
      $region60: #{basic_block_forward.1} parent=55 // pred_fallthru
        _
    $region56: #{basic_block_forward.1} parent=5 // pred_fallthru
      _
    %p2238 = scmp.le.s32.totalorder 2, %s15
    // Predicated region
    $region61: #{basic_block_forward.1} parent=5 // pred_check
      %p2239 = pneg %p2238
    $region62: #{basic_block_forward.1} parent=5 // pred_check_branch
      %2241 = sbr.rel (%p2239) target = $region64
    $region63: #{basic_block_forward.1} parent=5 // pred_region
      %s2242 = ssub.s32 %s15, 2
      // Predicated region
      $region65: #{basic_block_forward.1} parent=63 // pred_check
        %p2243 = pneg %p238
      $region66: #{basic_block_forward.1} parent=63 // pred_check_branch
        %2245 = sbr.rel (%p2243) target = $region68
      $region67: #{basic_block_forward.1} parent=63 // pred_region
        %p2246 = scmp.lt.s32.totalorder %s21, 1
        %s2247 = scalar_select %p2246, %s21, 1
        %s2248 = smul.addr %s2247, 8
        %s2249 = smul.addr %s2248, 8
        %s2250 = scalar_lea.vmem %s9, %s2249
      $region68: #{basic_block_forward.1} parent=63 // pred_fallthru
        _
    $region64: #{basic_block_forward.1} parent=5 // pred_fallthru
      _
  $region6: #{basic_block_forward.1} parent=0 // loop_footer
    %s19 = sadd.s32 1, %s15
  $region7: #{basic_block_forward.1} parent=0 // loop_footer_branch
    %14 = sbr.rel target = $region3
  $region8: #{basic_block_forward.1} parent=0 // loop_exit
    _

</llo_original>
